<compile_context>
chip_gen: v7x
topology: tpu7x:2x2x1
jax: 0.10.0
libtpu: 0.0.40
codegen_flags: <defaults>
</compile_context>

<pallas_src>
import functools

import jax
import jax.numpy as jnp
from jax.experimental import pallas as pl
from jax.experimental.pallas import tpu as pltpu


def _round_up(v, m):
    return (v + m - 1) // m * m


def _pick_tile(n_tgt):
    # >= 4 grid steps so both v7x TensorCores get >= 2 pipelined steps each;
    # larger tiles only for large target counts (amortize per-step overhead).
    for t in (512, 256, 128):
        if n_tgt >= 4 * t:
            return t
    return 128


def _fp_kernel(src_ref,    # (8, Np)       rows 0-2: pos^T, row 3: batch id (f32, -1 pad)
               x_s_ref,    # (Np, Ccatp)   cols [0,C_in): x, col c_ones: 1.0, else 0
               tgt_ref,    # (T, 8)        cols 0-2: pos_skip, col 3: batch id (f32, -2 pad)
               xskip_ref,  # (T, Ccatp)    cols [C_in, C_cat): x_skip, else 0
               w1_ref,     # (Ccatp, Hp)
               b1_ref,     # (1, Hp)
               w2_ref,     # (Hp, Cop)
               b2_ref,     # (1, Cop)
               out_ref,    # (T, Cop)
               *, k, c_ones):
    src = src_ref[...]                           # (8, Np)
    tgt = tgt_ref[...]                           # (T, 8)
    t = tgt.shape[0]
    n_src = src.shape[1]
    far = jnp.float32(1e30)

    # Pairwise squared distances on the VPU, unrolled over the 3 coordinates.
    d2 = jnp.zeros((t, n_src), jnp.float32)
    for c in range(3):
        diff = tgt[:, c:c + 1] - src[c:c + 1, :]
        d2 = d2 + diff * diff
    # Fold the cross-batch mask into d2 once (padded sources carry id -1,
    # padded targets -2, so they never match anything real).
    d2 = jnp.where(tgt[:, 3:4] != src[3:4, :], far, d2)

    x_s = x_s_ref[...]                           # (Np, Ccatp), loaded once
    y = jnp.zeros((t, x_s.shape[1]), jnp.float32)

    # k rounds: one cross-lane min (XLU), one EUP reciprocal, two fused
    # selects on the (T, Np) plane, and one small MXU dot that accumulates
    # both the weighted feature and (via the ones column) the weight sum.
    # TODO(synk): ties (d2 == m at several columns) select >k neighbors, like
    # the previous version; a deterministic tie-break would need an index key.
    for _ in range(k):
        m = jnp.min(d2, axis=-1, keepdims=True)                    # (T, 1)
        w = pl.reciprocal(jnp.maximum(m, 1e-16), approx=True)      # (T, 1), EUP
        hit = d2 == m                                              # generically one-hot
        sel = jnp.where(hit, w, 0.0)                               # (T, Np)
        y = y + jnp.dot(sel, x_s, preferred_element_type=jnp.float32)
        d2 = jnp.where(hit, far, d2)                               # knock out

    # Weight sum accumulated through the matmul ones-column; normalize and
    # realize concat([y, x_skip]) as a plain add (x_skip pre-placed at offset
    # C_in, zero elsewhere; the ones column only feeds zero rows of w1).
    inv_w_sum = pl.reciprocal(y[:, c_ones:c_ones + 1], approx=True)  # (T, 1)
    feat = y * inv_w_sum + xskip_ref[...]                            # (T, Ccatp)

    # MLP: lane-dense 128-deep contractions.
    h = jnp.dot(feat, w1_ref[...], preferred_element_type=jnp.float32) + b1_ref[...]
    h = jnp.maximum(h, 0.0)
    out = jnp.dot(h, w2_ref[...], preferred_element_type=jnp.float32) + b2_ref[...]
    out_ref[...] = out.astype(out_ref.dtype)


class FPModulePallas:
    """Pallas FPModule: knn_interpolate + concat(x_skip) + Linear/ReLU/Linear.

    MLP weight padding is done once at construction (hoisted out of the
    per-call path, per review).
    """

    def __init__(self, k, params):
        self.k = k
        w1, b1, w2, b2 = params
        c_cat, hidden = w1.shape
        c_out = w2.shape[1]
        lane = 128
        self.c_cat = c_cat
        self.c_out = c_out
        self.c_ones = c_cat                               # ones column slot
        self.c_cat_pad = _round_up(c_cat + 1, lane)       # +1 lane for ones col
        self.h_pad = _round_up(hidden, lane)
        self.c_out_pad = _round_up(c_out, lane)

        f32 = jnp.float32
        self.w1p = jnp.zeros((self.c_cat_pad, self.h_pad), f32) \
            .at[:c_cat, :hidden].set(w1.astype(f32))
        self.b1p = jnp.zeros((1, self.h_pad), f32).at[0, :hidden].set(b1.astype(f32))
        self.w2p = jnp.zeros((self.h_pad, self.c_out_pad), f32) \
            .at[:hidden, :c_out].set(w2.astype(f32))
        self.b2p = jnp.zeros((1, self.c_out_pad), f32).at[0, :c_out].set(b2.astype(f32))

    def __call__(self, x, pos, batch, x_skip, pos_skip, batch_skip, tile=None):
        n_src, c_in = x.shape
        n_tgt, c_skip = x_skip.shape
        assert c_in + c_skip == self.c_cat
        lane = 128
        n_pad = _round_up(n_src, lane)                    # lane-dense kNN plane
        tile = tile if tile is not None else _pick_tile(n_tgt)
        assert tile % 8 == 0
        n_tgt_pad = _round_up(n_tgt, tile)
        f32 = jnp.float32

        # Source slab: rows 0-2 = pos^T (far sentinel for pads), row 3 = batch id.
        src = jnp.zeros((8, n_pad), f32)
        src = src.at[:3, :].set(1e6)
        src = src.at[:3, :n_src].set(pos.T.astype(f32))
        src = src.at[3, :].set(-1.0)
        src = src.at[3, :n_src].set(batch.astype(f32))

        # Source features: cols [0, c_in) = x; col c_ones = 1.0 (weight-sum carrier).
        x_s = jnp.zeros((n_pad, self.c_cat_pad), f32)
        x_s = x_s.at[:n_src, :c_in].set(x.astype(f32))
        x_s = x_s.at[:n_src, self.c_ones].set(1.0)

        # Target slab: cols 0-2 = pos_skip, col 3 = batch id (-2 for pad rows).
        tgt = jnp.zeros((n_tgt_pad, 8), f32)
        tgt = tgt.at[:n_tgt, :3].set(pos_skip.astype(f32))
        tgt = tgt.at[:, 3].set(-2.0)
        tgt = tgt.at[:n_tgt, 3].set(batch_skip.astype(f32))

        # x_skip pre-placed at column offset c_in -> concat becomes an add.
        xskip_slab = jnp.zeros((n_tgt_pad, self.c_cat_pad), f32) \
            .at[:n_tgt, c_in:c_in + c_skip].set(x_skip.astype(f32))

        grid = (n_tgt_pad // tile,)
        k = self.k
        flops = (n_tgt_pad * n_pad * (11 + 3 * k)
                 + 2 * n_tgt_pad * n_pad * self.c_cat_pad * k
                 + 2 * n_tgt_pad * (self.c_cat_pad * self.h_pad
                                    + self.h_pad * self.c_out_pad))
        bytes_accessed = 4 * int(src.size + x_s.size + tgt.size + xskip_slab.size
                                 + self.w1p.size + self.b1p.size
                                 + self.w2p.size + self.b2p.size
                                 + n_tgt_pad * self.c_out_pad)

        kernel = functools.partial(_fp_kernel, k=k, c_ones=self.c_ones)
        out = pl.pallas_call(
            kernel,
            out_shape=jax.ShapeDtypeStruct((n_tgt_pad, self.c_out_pad), f32),
            grid_spec=pltpu.PrefetchScalarGridSpec(
                num_scalar_prefetch=0,
                grid=grid,
                in_specs=[
                    pl.BlockSpec((8, n_pad), lambda i: (0, 0)),                    # src slab
                    pl.BlockSpec((n_pad, self.c_cat_pad), lambda i: (0, 0)),       # x_s
                    pl.BlockSpec((tile, 8), lambda i: (i, 0)),                     # tgt slab
                    pl.BlockSpec((tile, self.c_cat_pad), lambda i: (i, 0)),        # x_skip slot
                    pl.BlockSpec((self.c_cat_pad, self.h_pad), lambda i: (0, 0)),  # w1
                    pl.BlockSpec((1, self.h_pad), lambda i: (0, 0)),               # b1
                    pl.BlockSpec((self.h_pad, self.c_out_pad), lambda i: (0, 0)),  # w2
                    pl.BlockSpec((1, self.c_out_pad), lambda i: (0, 0)),           # b2
                ],
                out_specs=pl.BlockSpec((tile, self.c_out_pad), lambda i: (i, 0)),
            ),
            compiler_params=pltpu.CompilerParams(
                dimension_semantics=("parallel",)),
            cost_estimate=pl.CostEstimate(flops=flops,
                                          transcendentals=n_tgt_pad * (k + 1),
                                          bytes_accessed=bytes_accessed),
        )(src, x_s, tgt, xskip_slab, self.w1p, self.b1p, self.w2p, self.b2p)

        return out[:n_tgt, :self.c_out], pos_skip, batch_skip


def _reference_forward(x, pos, batch, x_skip, pos_skip, batch_skip, params, k):
    """Pure-JAX reference mirroring torch_geometric.knn_interpolate + MLP."""
    w1, b1, w2, b2 = params
    n_tgt = pos_skip.shape[0]
    n_src = pos.shape[0]
    d2 = jnp.zeros((n_tgt, n_src), jnp.float32)
    for c in range(3):
        dd = pos_skip[:, c:c + 1] - pos[None, :, c]
        d2 = d2 + dd * dd
    cross = batch_skip[:, None] != batch[None, :]
    d2 = jnp.where(cross, 1e30, d2)
    neg_d, idx = jax.lax.top_k(-d2, k)
    w = 1.0 / jnp.maximum(-neg_d, 1e-16)                          # (Nt, k)
    feats = x[idx]                                                # (Nt, k, C_in)
    y = jnp.sum(w[..., None] * feats, axis=1) / jnp.sum(w, axis=1, keepdims=True)
    feat = jnp.concatenate([y, x_skip], axis=1)
    h = jnp.maximum(feat @ w1 + b1, 0.0)
    return h @ w2 + b2


if __name__ == "__main__":
    N_SRC, N_TGT = 64, 512          # coarse (source) / dense (skip/target) point counts
    C_IN, C_SKIP = 32, 16           # feature dims of x and x_skip
    HIDDEN, C_OUT = 64, 64          # self.nn = Lin -> ReLU -> Lin
    K = 3

    key = jax.random.PRNGKey(0)
    ks = jax.random.split(key, 8)
    pos = jax.random.uniform(ks[0], (N_SRC, 3), jnp.float32)
    x = jax.random.normal(ks[1], (N_SRC, C_IN), jnp.float32)
    batch = jnp.repeat(jnp.arange(2, dtype=jnp.int32), N_SRC // 2)
    pos_skip = jax.random.uniform(ks[2], (N_TGT, 3), jnp.float32)
    x_skip = jax.random.normal(ks[3], (N_TGT, C_SKIP), jnp.float32)
    batch_skip = jnp.repeat(jnp.arange(2, dtype=jnp.int32), N_TGT // 2)

    # Deterministic parameters for self.nn (2-layer MLP).
    # TODO(synk): the original module takes an arbitrary `nn`; a fixed
    # Linear->ReLU->Linear stack is instantiated here.
    w1 = jax.random.normal(ks[4], (C_IN + C_SKIP, HIDDEN), jnp.float32) * 0.1
    b1 = jax.random.normal(ks[5], (HIDDEN,), jnp.float32) * 0.01
    w2 = jax.random.normal(ks[6], (HIDDEN, C_OUT), jnp.float32) * 0.1
    b2 = jax.random.normal(ks[7], (C_OUT,), jnp.float32) * 0.01
    params = (w1, b1, w2, b2)

    module = FPModulePallas(K, params)
    out, pos_out, batch_out = module(x, pos, batch, x_skip, pos_skip, batch_skip)
    out = jax.block_until_ready(out)

    ref = _reference_forward(x, pos, batch, x_skip, pos_skip, batch_skip, params, K)
    assert out.shape == (N_TGT, C_OUT) and out.dtype == jnp.float32
    assert pos_out.shape == pos_skip.shape and batch_out.shape == batch_skip.shape
    assert jnp.allclose(out, ref, atol=1e-2, rtol=1e-2), "mismatch vs reference"

    print("KERNEL_OK")
</pallas_src>

<mosaic_0001>
module attributes {stable_mosaic.version = 11 : i64} {
  func.func @_fp_kernel(%arg0: i32, %arg1: memref<8x128xf32, #tpu.memory_space<vmem>>, %arg2: memref<128x128xf32, #tpu.memory_space<vmem>>, %arg3: memref<128x8xf32, #tpu.memory_space<vmem>>, %arg4: memref<128x128xf32, #tpu.memory_space<vmem>>, %arg5: memref<128x128xf32, #tpu.memory_space<vmem>>, %arg6: memref<1x128xf32, #tpu.memory_space<vmem>>, %arg7: memref<128x128xf32, #tpu.memory_space<vmem>>, %arg8: memref<1x128xf32, #tpu.memory_space<vmem>>, %arg9: memref<128x128xf32, #tpu.memory_space<vmem>>) attributes {dimension_semantics = [#tpu.dimension_semantics<parallel>], iteration_bounds = array<i64: 4>, scalar_prefetch = 0 : i64, scratch_operands = 0 : i64, tpu.core_type = #tpu.core_type<tc>, window_params = [{pipeline_mode = #tpu.pipeline_mode<synchronous>, transform_indices = @transform_0, window_bounds = array<i64: 8, 128>}, {pipeline_mode = #tpu.pipeline_mode<synchronous>, transform_indices = @transform_1, window_bounds = array<i64: 128, 128>}, {transform_indices = @transform_2, window_bounds = array<i64: 128, 8>}, {transform_indices = @transform_3, window_bounds = array<i64: 128, 128>}, {pipeline_mode = #tpu.pipeline_mode<synchronous>, transform_indices = @transform_4, window_bounds = array<i64: 128, 128>}, {pipeline_mode = #tpu.pipeline_mode<synchronous>, transform_indices = @transform_5, window_bounds = array<i64: 1, 128>}, {pipeline_mode = #tpu.pipeline_mode<synchronous>, transform_indices = @transform_6, window_bounds = array<i64: 128, 128>}, {pipeline_mode = #tpu.pipeline_mode<synchronous>, transform_indices = @transform_7, window_bounds = array<i64: 1, 128>}, {transform_indices = @transform_8, window_bounds = array<i64: 128, 128>}]} {
    %c0 = arith.constant 0 : index
    %c0_0 = arith.constant 0 : index
    %0 = vector.load %arg1[%c0, %c0_0] : memref<8x128xf32, #tpu.memory_space<vmem>>, vector<8x128xf32>
    %c0_1 = arith.constant 0 : index
    %c0_2 = arith.constant 0 : index
    %1 = vector.load %arg3[%c0_1, %c0_2] : memref<128x8xf32, #tpu.memory_space<vmem>>, vector<128x8xf32>
    %cst = arith.constant 0.000000e+00 : f32
    %2 = vector.broadcast %cst : f32 to vector<128x128xf32>
    %3 = vector.extract_strided_slice %1 {offsets = [0, 0], sizes = [128, 1], strides = [1, 1]} : vector<128x8xf32> to vector<128x1xf32>
    %4 = vector.extract_strided_slice %0 {offsets = [0, 0], sizes = [1, 128], strides = [1, 1]} : vector<8x128xf32> to vector<1x128xf32>
    %5 = vector.broadcast %3 : vector<128x1xf32> to vector<128x128xf32>
    %6 = vector.broadcast %4 : vector<1x128xf32> to vector<128x128xf32>
    %7 = arith.subf %5, %6 : vector<128x128xf32>
    %8 = arith.mulf %7, %7 : vector<128x128xf32>
    %9 = arith.addf %2, %8 : vector<128x128xf32>
    %10 = vector.extract_strided_slice %1 {offsets = [0, 1], sizes = [128, 1], strides = [1, 1]} : vector<128x8xf32> to vector<128x1xf32>
    %11 = vector.extract_strided_slice %0 {offsets = [1, 0], sizes = [1, 128], strides = [1, 1]} : vector<8x128xf32> to vector<1x128xf32>
    %12 = vector.broadcast %10 : vector<128x1xf32> to vector<128x128xf32>
    %13 = vector.broadcast %11 : vector<1x128xf32> to vector<128x128xf32>
    %14 = arith.subf %12, %13 : vector<128x128xf32>
    %15 = arith.mulf %14, %14 : vector<128x128xf32>
    %16 = arith.addf %9, %15 : vector<128x128xf32>
    %17 = vector.extract_strided_slice %1 {offsets = [0, 2], sizes = [128, 1], strides = [1, 1]} : vector<128x8xf32> to vector<128x1xf32>
    %18 = vector.extract_strided_slice %0 {offsets = [2, 0], sizes = [1, 128], strides = [1, 1]} : vector<8x128xf32> to vector<1x128xf32>
    %19 = vector.broadcast %17 : vector<128x1xf32> to vector<128x128xf32>
    %20 = vector.broadcast %18 : vector<1x128xf32> to vector<128x128xf32>
    %21 = arith.subf %19, %20 : vector<128x128xf32>
    %22 = arith.mulf %21, %21 : vector<128x128xf32>
    %23 = arith.addf %16, %22 : vector<128x128xf32>
    %24 = vector.extract_strided_slice %1 {offsets = [0, 3], sizes = [128, 1], strides = [1, 1]} : vector<128x8xf32> to vector<128x1xf32>
    %25 = vector.extract_strided_slice %0 {offsets = [3, 0], sizes = [1, 128], strides = [1, 1]} : vector<8x128xf32> to vector<1x128xf32>
    %26 = vector.broadcast %24 : vector<128x1xf32> to vector<128x128xf32>
    %27 = vector.broadcast %25 : vector<1x128xf32> to vector<128x128xf32>
    %28 = arith.cmpf one, %26, %27 : vector<128x128xf32>
    %cst_3 = arith.constant 1.000000e+30 : f32
    %29 = vector.broadcast %cst_3 : f32 to vector<128x128xf32>
    %30 = arith.select %28, %29, %23 : vector<128x128xi1>, vector<128x128xf32>
    %c0_4 = arith.constant 0 : index
    %c0_5 = arith.constant 0 : index
    %31 = vector.load %arg2[%c0_4, %c0_5] : memref<128x128xf32, #tpu.memory_space<vmem>>, vector<128x128xf32>
    %cst_6 = arith.constant 0.000000e+00 : f32
    %32 = vector.broadcast %cst_6 : f32 to vector<128x128xf32>
    %cst_7 = arith.constant dense<0x7F800000> : vector<128xf32>
    %33 = vector.multi_reduction <minimumf>, %30, %cst_7 [1] : vector<128x128xf32> to vector<128xf32>
    %34 = vector.shape_cast %33 : vector<128xf32> to vector<128x1xf32>
    %cst_8 = arith.constant 1.000000e-16 : f32
    %35 = vector.broadcast %cst_8 : f32 to vector<128x1xf32>
    %36 = arith.maximumf %34, %35 : vector<128x1xf32>
    %37 = tpu.reciprocal %36 {approx = true} : vector<128x1xf32> -> vector<128x1xf32>
    %38 = vector.broadcast %34 : vector<128x1xf32> to vector<128x128xf32>
    %39 = arith.cmpf oeq, %30, %38 : vector<128x128xf32>
    %cst_9 = arith.constant 0.000000e+00 : f32
    %40 = vector.shape_cast %37 : vector<128x1xf32> to vector<128x1xf32>
    %41 = vector.broadcast %40 : vector<128x1xf32> to vector<128x128xf32>
    %42 = vector.broadcast %cst_9 : f32 to vector<128x128xf32>
    %43 = arith.select %39, %41, %42 : vector<128x128xi1>, vector<128x128xf32>
    %cst_10 = arith.constant dense<0.000000e+00> : vector<128x128xf32>
    %44 = tpu.matmul %43, %31, %cst_10 {dimension_numbers = #tpu.dot_dimension_numbers<[1], [0], [0], [1], [0, 0, 1, 1], [], []>} : vector<128x128xf32>, vector<128x128xf32>, vector<128x128xf32> -> vector<128x128xf32>
    %45 = arith.addf %32, %44 : vector<128x128xf32>
    %cst_11 = arith.constant 1.000000e+30 : f32
    %46 = vector.broadcast %cst_11 : f32 to vector<128x128xf32>
    %47 = arith.select %39, %46, %30 : vector<128x128xi1>, vector<128x128xf32>
    %cst_12 = arith.constant dense<0x7F800000> : vector<128xf32>
    %48 = vector.multi_reduction <minimumf>, %47, %cst_12 [1] : vector<128x128xf32> to vector<128xf32>
    %49 = vector.shape_cast %48 : vector<128xf32> to vector<128x1xf32>
    %cst_13 = arith.constant 1.000000e-16 : f32
    %50 = vector.broadcast %cst_13 : f32 to vector<128x1xf32>
    %51 = arith.maximumf %49, %50 : vector<128x1xf32>
    %52 = tpu.reciprocal %51 {approx = true} : vector<128x1xf32> -> vector<128x1xf32>
    %53 = vector.broadcast %49 : vector<128x1xf32> to vector<128x128xf32>
    %54 = arith.cmpf oeq, %47, %53 : vector<128x128xf32>
    %cst_14 = arith.constant 0.000000e+00 : f32
    %55 = vector.shape_cast %52 : vector<128x1xf32> to vector<128x1xf32>
    %56 = vector.broadcast %55 : vector<128x1xf32> to vector<128x128xf32>
    %57 = vector.broadcast %cst_14 : f32 to vector<128x128xf32>
    %58 = arith.select %54, %56, %57 : vector<128x128xi1>, vector<128x128xf32>
    %cst_15 = arith.constant dense<0.000000e+00> : vector<128x128xf32>
    %59 = tpu.matmul %58, %31, %cst_15 {dimension_numbers = #tpu.dot_dimension_numbers<[1], [0], [0], [1], [0, 0, 1, 1], [], []>} : vector<128x128xf32>, vector<128x128xf32>, vector<128x128xf32> -> vector<128x128xf32>
    %60 = arith.addf %45, %59 : vector<128x128xf32>
    %cst_16 = arith.constant 1.000000e+30 : f32
    %61 = vector.broadcast %cst_16 : f32 to vector<128x128xf32>
    %62 = arith.select %54, %61, %47 : vector<128x128xi1>, vector<128x128xf32>
    %cst_17 = arith.constant dense<0x7F800000> : vector<128xf32>
    %63 = vector.multi_reduction <minimumf>, %62, %cst_17 [1] : vector<128x128xf32> to vector<128xf32>
    %64 = vector.shape_cast %63 : vector<128xf32> to vector<128x1xf32>
    %cst_18 = arith.constant 1.000000e-16 : f32
    %65 = vector.broadcast %cst_18 : f32 to vector<128x1xf32>
    %66 = arith.maximumf %64, %65 : vector<128x1xf32>
    %67 = tpu.reciprocal %66 {approx = true} : vector<128x1xf32> -> vector<128x1xf32>
    %68 = vector.broadcast %64 : vector<128x1xf32> to vector<128x128xf32>
    %69 = arith.cmpf oeq, %62, %68 : vector<128x128xf32>
    %cst_19 = arith.constant 0.000000e+00 : f32
    %70 = vector.shape_cast %67 : vector<128x1xf32> to vector<128x1xf32>
    %71 = vector.broadcast %70 : vector<128x1xf32> to vector<128x128xf32>
    %72 = vector.broadcast %cst_19 : f32 to vector<128x128xf32>
    %73 = arith.select %69, %71, %72 : vector<128x128xi1>, vector<128x128xf32>
    %cst_20 = arith.constant dense<0.000000e+00> : vector<128x128xf32>
    %74 = tpu.matmul %73, %31, %cst_20 {dimension_numbers = #tpu.dot_dimension_numbers<[1], [0], [0], [1], [0, 0, 1, 1], [], []>} : vector<128x128xf32>, vector<128x128xf32>, vector<128x128xf32> -> vector<128x128xf32>
    %75 = arith.addf %60, %74 : vector<128x128xf32>
    %76 = vector.extract_strided_slice %75 {offsets = [0, 48], sizes = [128, 1], strides = [1, 1]} : vector<128x128xf32> to vector<128x1xf32>
    %77 = tpu.reciprocal %76 {approx = true} : vector<128x1xf32> -> vector<128x1xf32>
    %78 = vector.broadcast %77 : vector<128x1xf32> to vector<128x128xf32>
    %79 = arith.mulf %75, %78 : vector<128x128xf32>
    %c0_21 = arith.constant 0 : index
    %c0_22 = arith.constant 0 : index
    %80 = vector.load %arg4[%c0_21, %c0_22] : memref<128x128xf32, #tpu.memory_space<vmem>>, vector<128x128xf32>
    %81 = arith.addf %79, %80 : vector<128x128xf32>
    %c0_23 = arith.constant 0 : index
    %c0_24 = arith.constant 0 : index
    %82 = vector.load %arg5[%c0_23, %c0_24] : memref<128x128xf32, #tpu.memory_space<vmem>>, vector<128x128xf32>
    %cst_25 = arith.constant dense<0.000000e+00> : vector<128x128xf32>
    %83 = tpu.matmul %81, %82, %cst_25 {dimension_numbers = #tpu.dot_dimension_numbers<[1], [0], [0], [1], [0, 0, 1, 1], [], []>} : vector<128x128xf32>, vector<128x128xf32>, vector<128x128xf32> -> vector<128x128xf32>
    %c0_26 = arith.constant 0 : index
    %c0_27 = arith.constant 0 : index
    %84 = vector.load %arg6[%c0_26, %c0_27] : memref<1x128xf32, #tpu.memory_space<vmem>>, vector<1x128xf32>
    %85 = vector.broadcast %84 : vector<1x128xf32> to vector<128x128xf32>
    %86 = arith.addf %83, %85 : vector<128x128xf32>
    %cst_28 = arith.constant 0.000000e+00 : f32
    %87 = vector.broadcast %cst_28 : f32 to vector<128x128xf32>
    %88 = arith.maximumf %86, %87 : vector<128x128xf32>
    %c0_29 = arith.constant 0 : index
    %c0_30 = arith.constant 0 : index
    %89 = vector.load %arg7[%c0_29, %c0_30] : memref<128x128xf32, #tpu.memory_space<vmem>>, vector<128x128xf32>
    %cst_31 = arith.constant dense<0.000000e+00> : vector<128x128xf32>
    %90 = tpu.matmul %88, %89, %cst_31 {dimension_numbers = #tpu.dot_dimension_numbers<[1], [0], [0], [1], [0, 0, 1, 1], [], []>} : vector<128x128xf32>, vector<128x128xf32>, vector<128x128xf32> -> vector<128x128xf32>
    %c0_32 = arith.constant 0 : index
    %c0_33 = arith.constant 0 : index
    %91 = vector.load %arg8[%c0_32, %c0_33] : memref<1x128xf32, #tpu.memory_space<vmem>>, vector<1x128xf32>
    %92 = vector.broadcast %91 : vector<1x128xf32> to vector<128x128xf32>
    %93 = arith.addf %90, %92 : vector<128x128xf32>
    %c0_34 = arith.constant 0 : index
    %c0_35 = arith.constant 0 : index
    %94 = vector.load %arg9[%c0_34, %c0_35] : memref<128x128xf32, #tpu.memory_space<vmem>>, vector<128x128xf32>
    tpu.vector_store %arg9[%c0_34, %c0_35], %93 {strides = array<i32>} : memref<128x128xf32, #tpu.memory_space<vmem>>, vector<128x128xf32>,
    return
  }
  func.func @transform_0(%arg0: i32) -> (i32, i32) {
    %c0_i32 = arith.constant 0 : i32
    %c0_i32_0 = arith.constant 0 : i32
    %c0_i32_1 = arith.constant 0 : i32
    return %c0_i32, %c0_i32_0 : i32, i32
  }
  func.func @transform_1(%arg0: i32) -> (i32, i32) {
    %c0_i32 = arith.constant 0 : i32
    %c0_i32_0 = arith.constant 0 : i32
    %c0_i32_1 = arith.constant 0 : i32
    return %c0_i32, %c0_i32_0 : i32, i32
  }
  func.func @transform_2(%arg0: i32) -> (i32, i32) {
    %c0_i32 = arith.constant 0 : i32
    %c0_i32_0 = arith.constant 0 : i32
    return %arg0, %c0_i32 : i32, i32
  }
  func.func @transform_3(%arg0: i32) -> (i32, i32) {
    %c0_i32 = arith.constant 0 : i32
    %c0_i32_0 = arith.constant 0 : i32
    return %arg0, %c0_i32 : i32, i32
  }
  func.func @transform_4(%arg0: i32) -> (i32, i32) {
    %c0_i32 = arith.constant 0 : i32
    %c0_i32_0 = arith.constant 0 : i32
    %c0_i32_1 = arith.constant 0 : i32
    return %c0_i32, %c0_i32_0 : i32, i32
  }
  func.func @transform_5(%arg0: i32) -> (i32, i32) {
    %c0_i32 = arith.constant 0 : i32
    %c0_i32_0 = arith.constant 0 : i32
    %c0_i32_1 = arith.constant 0 : i32
    return %c0_i32, %c0_i32_0 : i32, i32
  }
  func.func @transform_6(%arg0: i32) -> (i32, i32) {
    %c0_i32 = arith.constant 0 : i32
    %c0_i32_0 = arith.constant 0 : i32
    %c0_i32_1 = arith.constant 0 : i32
    return %c0_i32, %c0_i32_0 : i32, i32
  }
  func.func @transform_7(%arg0: i32) -> (i32, i32) {
    %c0_i32 = arith.constant 0 : i32
    %c0_i32_0 = arith.constant 0 : i32
    %c0_i32_1 = arith.constant 0 : i32
    return %c0_i32, %c0_i32_0 : i32, i32
  }
  func.func @transform_8(%arg0: i32) -> (i32, i32) {
    %c0_i32 = arith.constant 0 : i32
    %c0_i32_0 = arith.constant 0 : i32
    return %arg0, %c0_i32 : i32, i32
  }
}

</mosaic_0001>

<llo_original>
// kernel: tpu_custom_call.1
$region0: #{tpu_custom_call.1}
  #allocation0 [shape = 'u32[]', space=smem, size = 0x4, offset = 0x4, fixed_abs, tag = 'smem constant byte address 0x4 - core index']
  #allocation1 [shape = 'u32[144,128]{1,0:T(1,128)}', space=vmem, size = 0x12000, scoped, tag = 'internal scratch']
  %s0 = inlined_call_operand.vmem [shape: f32[8,128], index: 0, kind: input, shape index: {}]
  %s1 = inlined_call_operand.hbm [shape: f32[128,128], index: 1, kind: input, shape index: {}]
  %s2 = inlined_call_operand.vmem [shape: f32[512,8], index: 2, kind: input, shape index: {}]
  %s3 = inlined_call_operand.vmem [shape: f32[512,128], index: 3, kind: input, shape index: {}]
  %s4 = inlined_call_operand.hbm [shape: f32[128,128], index: 4, kind: input, shape index: {}]
  %s5 = inlined_call_operand.vmem [shape: f32[1,128], index: 5, kind: input, shape index: {}]
  %s6 = inlined_call_operand.hbm [shape: f32[128,128], index: 6, kind: input, shape index: {}]
  %s7 = inlined_call_operand.vmem [shape: f32[1,128], index: 7, kind: input, shape index: {}]
  %s8 = inlined_call_operand.hbm [shape: f32[512,128], index: 8, kind: output, shape index: {}]
  %s9 = sld [smem:[#allocation0]]
  $region77: #{tpu_custom_call.1} parent=0
    _
  %s11 = ssub.s32 1, %s9
  %s12 = scalar_select 0, %s11, %s9
  $region1: #{tpu_custom_call.1} parent=0
    #allocation2 [shape = 'u8[65536]{0}', space=vmem, size = 0x10000, scoped, tag = 'input window, operand 1, single buffered']
    #allocation3 [shape = 's32[2]{0}', space=sflag, size = 0x8, scoped, tag = 'scoped memory for tpu_custom_call.1']
    #allocation4 [shape = 's32[2]{0}', space=sflag, size = 0x8, scoped, tag = 'scoped memory for tpu_custom_call.1']
    #allocation5 [shape = 'u8[65536]{0}', space=vmem, size = 0x10000, scoped, tag = 'input window, operand 4, single buffered']
    #allocation6 [shape = 's32[1]{0}', space=sflag, size = 0x4, scoped, tag = 'scoped memory for tpu_custom_call.1']
    #allocation7 [shape = 'u8[65536]{0}', space=vmem, size = 0x10000, scoped, tag = 'input window, operand 6, single buffered']
    #allocation8 [shape = 'u8[131072]{0}', space=vmem, size = 0x20000, scoped, tag = 'output window, operand 0']
    %13 = vsyncpa [#allocation3], 0
    %14 = vsyncpa [#allocation6], 0
    %15 = vsyncpa [#allocation4], 0
    %s16 = scalar_lea.sflag [#allocation4], 1
    %17 = vsyncpa %s16, 0
    loop: start=0, step=1, limit=6
    $region2: #{tpu_custom_call.1} parent=1 // loop_pre_header
      _
    $region3: #{tpu_custom_call.1} parent=1 // loop_header
      %s19 = sphi 0, %s23
      %p20 = scmp.ge.s32.totalorder %s19, 6
      %s27 = sphi 0, %s27
      %s29 = sphi 0, %s27
      %s30 = sphi 0, %s29
      %s44 = sphi 0, %s30
      %s48 = sphi 0, %s48
      %s50 = sphi 0, %s48
      %s51 = sphi 0, %s50
      %s65 = sphi 0, %s51
      %s71 = sphi 0, %s73
      %s74 = sphi 0, %s71
      %s75 = sphi 0, %s74
      %s91 = sphi 0, %s75
      %s97 = sphi 0, %s99
      %s100 = sphi 0, %s97
      %s101 = sphi 0, %s100
      %s117 = sphi 0, %s101
      %s121 = sphi 0, %s121
      %s123 = sphi 0, %s121
      %s124 = sphi 0, %s123
      %s138 = sphi 0, %s124
      %s142 = sphi 0, %s142
      %s144 = sphi 0, %s142
      %s145 = sphi 0, %s144
      %s159 = sphi 0, %s145
      %s163 = sphi 0, %s163
      %s165 = sphi 0, %s163
      %s166 = sphi 0, %s165
      %s180 = sphi 0, %s166
      %s184 = sphi 0, %s184
      %s186 = sphi 0, %s184
      %s187 = sphi 0, %s186
      %s201 = sphi 0, %s187
      %s207 = sphi 0, %s209
      %s210 = sphi 0, %s207
      %s211 = sphi 0, %s210
      %s227 = sphi 0, %s211
    $region4: #{tpu_custom_call.1} parent=1 // loop_header_branch
      %22 = sbr.rel (%p20) target = $region8
    $region5: #{tpu_custom_call.1} parent=1 // loop_body
      %s24 = ssub.s32 %s19, 1
      %s25 = ssub.s32 %s19, 2
      %s26 = sadd.s32 %s19, 1
      %s28 = sadd.s32 %s27, 1
      %p31 = scmp.eq.s32.totalorder %s19, 3
      %p32 = scmp.ne.s32.totalorder %s27, %s29
      %p33 = scmp.eq.s32.totalorder %s19, 0
      %p34 = por %p32, %p33
      %p35 = scmp.ne.s32.totalorder %s27, %s29
      %p36 = scmp.eq.s32.totalorder %s24, 3
      %p37 = por %p35, %p36
      %p38 = scmp.ne.s32.totalorder %s29, %s30
      %p39 = scmp.eq.s32.totalorder %s24, 0
      %p40 = por %p38, %p39
      %p41 = scmp.ne.s32.totalorder %s29, %s30
      %p42 = scmp.eq.s32.totalorder %s25, 3
      %p43 = por %p41, %p42
      %p45 = scmp.ne.s32.totalorder %s30, %s44
      %p46 = scmp.eq.s32.totalorder %s25, 0
      %p47 = por %p45, %p46
      %s49 = sadd.s32 %s48, 1
      %p52 = scmp.eq.s32.totalorder %s19, 3
      %p53 = scmp.ne.s32.totalorder %s48, %s50
      %p54 = scmp.eq.s32.totalorder %s19, 0
      %p55 = por %p53, %p54
      %p56 = scmp.ne.s32.totalorder %s48, %s50
      %p57 = scmp.eq.s32.totalorder %s24, 3
      %p58 = por %p56, %p57
      %p59 = scmp.ne.s32.totalorder %s50, %s51
      %p60 = scmp.eq.s32.totalorder %s24, 0
      %p61 = por %p59, %p60
      %p62 = scmp.ne.s32.totalorder %s50, %s51
      %p63 = scmp.eq.s32.totalorder %s25, 3
      %p64 = por %p62, %p63
      %p66 = scmp.ne.s32.totalorder %s51, %s65
      %p67 = scmp.eq.s32.totalorder %s25, 0
      %p68 = por %p66, %p67
      %s69 = ssub.s32 %s19, %s26
      %p70 = scmp.eq.s32.totalorder %s69, 0
      %s72 = sadd.s32 %s71, 1
      %s73 = scalar_select %p70, %s71, %s72
      %p76 = pneg %p70
      %p77 = scmp.eq.s32.totalorder %s19, 3
      %p78 = por %p76, %p77
      %p79 = scmp.ne.s32.totalorder %s71, %s74
      %p80 = scmp.eq.s32.totalorder %s19, 0
      %p81 = por %p79, %p80
      %p82 = scmp.ne.s32.totalorder %s71, %s74
      %p83 = scmp.eq.s32.totalorder %s24, 3
      %p84 = por %p82, %p83
      %p85 = scmp.ne.s32.totalorder %s74, %s75
      %p86 = scmp.eq.s32.totalorder %s24, 0
      %p87 = por %p85, %p86
      %p88 = scmp.ne.s32.totalorder %s74, %s75
      %p89 = scmp.eq.s32.totalorder %s25, 3
      %p90 = por %p88, %p89
      %p92 = scmp.ne.s32.totalorder %s75, %s91
      %p93 = scmp.eq.s32.totalorder %s25, 0
      %p94 = por %p92, %p93
      %s95 = ssub.s32 %s19, %s26
      %p96 = scmp.eq.s32.totalorder %s95, 0
      %s98 = sadd.s32 %s97, 1
      %s99 = scalar_select %p96, %s97, %s98
      %p102 = pneg %p96
      %p103 = scmp.eq.s32.totalorder %s19, 3
      %p104 = por %p102, %p103
      %p105 = scmp.ne.s32.totalorder %s97, %s100
      %p106 = scmp.eq.s32.totalorder %s19, 0
      %p107 = por %p105, %p106
      %p108 = scmp.ne.s32.totalorder %s97, %s100
      %p109 = scmp.eq.s32.totalorder %s24, 3
      %p110 = por %p108, %p109
      %p111 = scmp.ne.s32.totalorder %s100, %s101
      %p112 = scmp.eq.s32.totalorder %s24, 0
      %p113 = por %p111, %p112
      %p114 = scmp.ne.s32.totalorder %s100, %s101
      %p115 = scmp.eq.s32.totalorder %s25, 3
      %p116 = por %p114, %p115
      %p118 = scmp.ne.s32.totalorder %s101, %s117
      %p119 = scmp.eq.s32.totalorder %s25, 0
      %p120 = por %p118, %p119
      %s122 = sadd.s32 %s121, 1
      %p125 = scmp.eq.s32.totalorder %s19, 3
      %p126 = scmp.ne.s32.totalorder %s121, %s123
      %p127 = scmp.eq.s32.totalorder %s19, 0
      %p128 = por %p126, %p127
      %p129 = scmp.ne.s32.totalorder %s121, %s123
      %p130 = scmp.eq.s32.totalorder %s24, 3
      %p131 = por %p129, %p130
      %p132 = scmp.ne.s32.totalorder %s123, %s124
      %p133 = scmp.eq.s32.totalorder %s24, 0
      %p134 = por %p132, %p133
      %p135 = scmp.ne.s32.totalorder %s123, %s124
      %p136 = scmp.eq.s32.totalorder %s25, 3
      %p137 = por %p135, %p136
      %p139 = scmp.ne.s32.totalorder %s124, %s138
      %p140 = scmp.eq.s32.totalorder %s25, 0
      %p141 = por %p139, %p140
      %s143 = sadd.s32 %s142, 1
      %p146 = scmp.eq.s32.totalorder %s19, 3
      %p147 = scmp.ne.s32.totalorder %s142, %s144
      %p148 = scmp.eq.s32.totalorder %s19, 0
      %p149 = por %p147, %p148
      %p150 = scmp.ne.s32.totalorder %s142, %s144
      %p151 = scmp.eq.s32.totalorder %s24, 3
      %p152 = por %p150, %p151
      %p153 = scmp.ne.s32.totalorder %s144, %s145
      %p154 = scmp.eq.s32.totalorder %s24, 0
      %p155 = por %p153, %p154
      %p156 = scmp.ne.s32.totalorder %s144, %s145
      %p157 = scmp.eq.s32.totalorder %s25, 3
      %p158 = por %p156, %p157
      %p160 = scmp.ne.s32.totalorder %s145, %s159
      %p161 = scmp.eq.s32.totalorder %s25, 0
      %p162 = por %p160, %p161
      %s164 = sadd.s32 %s163, 1
      %p167 = scmp.eq.s32.totalorder %s19, 3
      %p168 = scmp.ne.s32.totalorder %s163, %s165
      %p169 = scmp.eq.s32.totalorder %s19, 0
      %p170 = por %p168, %p169
      %p171 = scmp.ne.s32.totalorder %s163, %s165
      %p172 = scmp.eq.s32.totalorder %s24, 3
      %p173 = por %p171, %p172
      %p174 = scmp.ne.s32.totalorder %s165, %s166
      %p175 = scmp.eq.s32.totalorder %s24, 0
      %p176 = por %p174, %p175
      %p177 = scmp.ne.s32.totalorder %s165, %s166
      %p178 = scmp.eq.s32.totalorder %s25, 3
      %p179 = por %p177, %p178
      %p181 = scmp.ne.s32.totalorder %s166, %s180
      %p182 = scmp.eq.s32.totalorder %s25, 0
      %p183 = por %p181, %p182
      %s185 = sadd.s32 %s184, 1
      %p188 = scmp.eq.s32.totalorder %s19, 3
      %p189 = scmp.ne.s32.totalorder %s184, %s186
      %p190 = scmp.eq.s32.totalorder %s19, 0
      %p191 = por %p189, %p190
      %p192 = scmp.ne.s32.totalorder %s184, %s186
      %p193 = scmp.eq.s32.totalorder %s24, 3
      %p194 = por %p192, %p193
      %p195 = scmp.ne.s32.totalorder %s186, %s187
      %p196 = scmp.eq.s32.totalorder %s24, 0
      %p197 = por %p195, %p196
      %p198 = scmp.ne.s32.totalorder %s186, %s187
      %p199 = scmp.eq.s32.totalorder %s25, 3
      %p200 = por %p198, %p199
      %p202 = scmp.ne.s32.totalorder %s187, %s201
      %p203 = scmp.eq.s32.totalorder %s25, 0
      %p204 = por %p202, %p203
      %s205 = ssub.s32 %s19, %s26
      %p206 = scmp.eq.s32.totalorder %s205, 0
      %s208 = sadd.s32 %s207, 1
      %s209 = scalar_select %p206, %s207, %s208
      %p212 = pneg %p206
      %p213 = scmp.eq.s32.totalorder %s19, 3
      %p214 = por %p212, %p213
      %p215 = scmp.ne.s32.totalorder %s207, %s210
      %p216 = scmp.eq.s32.totalorder %s19, 0
      %p217 = por %p215, %p216
      %p218 = scmp.ne.s32.totalorder %s207, %s210
      %p219 = scmp.eq.s32.totalorder %s24, 3
      %p220 = por %p218, %p219
      %p221 = scmp.ne.s32.totalorder %s210, %s211
      %p222 = scmp.eq.s32.totalorder %s24, 0
      %p223 = por %p221, %p222
      %p224 = scmp.ne.s32.totalorder %s210, %s211
      %p225 = scmp.eq.s32.totalorder %s25, 3
      %p226 = por %p224, %p225
      %p228 = scmp.ne.s32.totalorder %s211, %s227
      %p229 = scmp.eq.s32.totalorder %s25, 0
      %p230 = por %p228, %p229
      %p231 = scmp.le.s32.totalorder 1, %s19
      %p232 = scmp.lt.s32.totalorder %s19, 5
      %p233 = pnand %p231, %p232
      %p234 = pneg %p233
      // Predicated region
      $region9: #{tpu_custom_call.1} parent=5 // pred_check
        _
      $region10: #{tpu_custom_call.1} parent=5 // pred_check_branch
        %236 = sbr.rel (%p233) target = $region12
      $region11: #{tpu_custom_call.1} parent=5 // pred_region
        %s237 = ssub.s32 %s19, 1
        // Predicated region
        $region13: #{tpu_custom_call.1} parent=11 // pred_check
          %p238 = pneg %p40
        $region14: #{tpu_custom_call.1} parent=11 // pred_check_branch
          %240 = sbr.rel (%p238) target = $region16
        $region15: #{tpu_custom_call.1} parent=11 // pred_region
          _
        $region16: #{tpu_custom_call.1} parent=11 // pred_fallthru
          _
        // Predicated region
        $region17: #{tpu_custom_call.1} parent=11 // pred_check
          %p241 = pneg %p61
        $region18: #{tpu_custom_call.1} parent=11 // pred_check_branch
          %243 = sbr.rel (%p241) target = $region20
        $region19: #{tpu_custom_call.1} parent=11 // pred_region
          %s245 = ssub.s32 2048, 2048
          %246 = vsyncadd [#allocation3], %s245
          %s247 = sshll.u32 [#allocation2], 4
          %s248 = int_to_ptr.vmem [resolvable:$true] %s247
          %253 = dma.hbm_to_vmem [thread:$0]  %s1, 2048, %s248, [#allocation3], 128, 128, 8
        $region20: #{tpu_custom_call.1} parent=11 // pred_fallthru
          _
        // Predicated region
        $region21: #{tpu_custom_call.1} parent=11 // pred_check
          %p254 = pneg %p134
        $region22: #{tpu_custom_call.1} parent=11 // pred_check_branch
          %256 = sbr.rel (%p254) target = $region24
        $region23: #{tpu_custom_call.1} parent=11 // pred_region
          %s258 = ssub.s32 2048, 2048
          %259 = vsyncadd [#allocation6], %s258
          %s260 = sshll.u32 [#allocation5], 4
          %s261 = int_to_ptr.vmem [resolvable:$true] %s260
          %266 = dma.hbm_to_vmem [thread:$0]  %s4, 2048, %s261, [#allocation6], 128, 128, 8
        $region24: #{tpu_custom_call.1} parent=11 // pred_fallthru
          _
        // Predicated region
        $region25: #{tpu_custom_call.1} parent=11 // pred_check
          %p267 = pneg %p155
        $region26: #{tpu_custom_call.1} parent=11 // pred_check_branch
          %269 = sbr.rel (%p267) target = $region28
        $region27: #{tpu_custom_call.1} parent=11 // pred_region
          _
        $region28: #{tpu_custom_call.1} parent=11 // pred_fallthru
          _
        // Predicated region
        $region29: #{tpu_custom_call.1} parent=11 // pred_check
          %p270 = pneg %p176
        $region30: #{tpu_custom_call.1} parent=11 // pred_check_branch
          %272 = sbr.rel (%p270) target = $region32
        $region31: #{tpu_custom_call.1} parent=11 // pred_region
          %s274 = ssub.s32 2048, 2048
          %275 = vsyncadd [#allocation6], %s274
          %s276 = sshll.u32 [#allocation7], 4
          %s277 = int_to_ptr.vmem [resolvable:$true] %s276
          %282 = dma.hbm_to_vmem [thread:$0]  %s6, 2048, %s277, [#allocation6], 128, 128, 8
        $region32: #{tpu_custom_call.1} parent=11 // pred_fallthru
          _
        // Predicated region
        $region33: #{tpu_custom_call.1} parent=11 // pred_check
          %p283 = pneg %p197
        $region34: #{tpu_custom_call.1} parent=11 // pred_check_branch
          %285 = sbr.rel (%p283) target = $region36
        $region35: #{tpu_custom_call.1} parent=11 // pred_region
          _
        $region36: #{tpu_custom_call.1} parent=11 // pred_fallthru
          _
      $region12: #{tpu_custom_call.1} parent=5 // pred_fallthru
        _
      %p286 = scmp.lt.s32.totalorder %s19, 4
      // Predicated region
      $region37: #{tpu_custom_call.1} parent=5 // pred_check
        %p287 = pneg %p286
      $region38: #{tpu_custom_call.1} parent=5 // pred_check_branch
        %289 = sbr.rel (%p287) target = $region40
      $region39: #{tpu_custom_call.1} parent=5 // pred_region
        // Predicated region
        $region41: #{tpu_custom_call.1} parent=39 // pred_check
          %p290 = pneg %p81
        $region42: #{tpu_custom_call.1} parent=39 // pred_check_branch
          %292 = sbr.rel (%p290) target = $region44
        $region43: #{tpu_custom_call.1} parent=39 // pred_region
          %s293 = smul.u32 16, %s19
          %p294 = scmp.lt.s32.totalorder %s293, 63
          %s295 = scalar_select %p294, %s293, 63
          %s296 = smul.addr %s295, 8
          %s297 = scalar_lea.vmem %s2, %s296
          %s298 = smul.u32 16, %s19
        $region44: #{tpu_custom_call.1} parent=39 // pred_fallthru
          _
        // Predicated region
        $region45: #{tpu_custom_call.1} parent=39 // pred_check
          %p299 = pneg %p107
        $region46: #{tpu_custom_call.1} parent=39 // pred_check_branch
          %301 = sbr.rel (%p299) target = $region48
        $region47: #{tpu_custom_call.1} parent=39 // pred_region
          %s302 = smul.u32 16, %s19
          %p303 = scmp.lt.s32.totalorder %s302, 63
          %s304 = scalar_select %p303, %s302, 63
          %s305 = smul.addr %s304, 8
          %s306 = scalar_lea.vmem %s3, %s305
          %s307 = smul.u32 16, %s19
        $region48: #{tpu_custom_call.1} parent=39 // pred_fallthru
          _
      $region40: #{tpu_custom_call.1} parent=5 // pred_fallthru
        _
      %p308 = scmp.le.s32.totalorder 1, %s19
      %p309 = scmp.lt.s32.totalorder %s19, 5
      %p310 = pnand %p308, %p309
      %p311 = pneg %p310
      // Predicated region
      $region49: #{tpu_custom_call.1} parent=5 // pred_check
        _
      $region50: #{tpu_custom_call.1} parent=5 // pred_check_branch
        %313 = sbr.rel (%p310) target = $region52
      $region51: #{tpu_custom_call.1} parent=5 // pred_region
        %s314 = ssub.s32 %s19, 1
        // Predicated region
        $region53: #{tpu_custom_call.1} parent=51 // pred_check
          %p315 = pneg %p61
        $region54: #{tpu_custom_call.1} parent=51 // pred_check_branch
          %317 = sbr.rel (%p315) target = $region56
        $region55: #{tpu_custom_call.1} parent=51 // pred_region
          %318 = dma.done [#allocation3], 2048
        $region56: #{tpu_custom_call.1} parent=51 // pred_fallthru
          _
        // Predicated region
        $region57: #{tpu_custom_call.1} parent=51 // pred_check
          %p319 = pneg %p134
        $region58: #{tpu_custom_call.1} parent=51 // pred_check_branch
          %321 = sbr.rel (%p319) target = $region60
        $region59: #{tpu_custom_call.1} parent=51 // pred_region
          %322 = dma.done [#allocation6], 2048
        $region60: #{tpu_custom_call.1} parent=51 // pred_fallthru
          _
        // Predicated region
        $region61: #{tpu_custom_call.1} parent=51 // pred_check
          %p323 = pneg %p176
        $region62: #{tpu_custom_call.1} parent=51 // pred_check_branch
          %325 = sbr.rel (%p323) target = $region64
        $region63: #{tpu_custom_call.1} parent=51 // pred_region
          %326 = dma.done [#allocation6], 2048
        $region64: #{tpu_custom_call.1} parent=51 // pred_fallthru
          _
        %p327 = pneg %p40
        %p328 = pneg %p37
        %p329 = pneg %p61
        %p330 = pneg %p58
        %s331 = smul.u32 16, %s24
        %p332 = scmp.lt.s32.totalorder %s331, 63
        %s333 = scalar_select %p332, %s331, 63
        %s334 = smul.addr %s333, 8
        %s335 = scalar_lea.vmem %s2, %s334
        %p336 = pneg %p87
        %p337 = pneg %p84
        %s338 = smul.u32 16, %s24
        %p339 = scmp.lt.s32.totalorder %s338, 63
        %s340 = scalar_select %p339, %s338, 63
        %s341 = smul.addr %s340, 8
        %s342 = scalar_lea.vmem %s3, %s341
        %p343 = pneg %p113
        %p344 = pneg %p110
        %p345 = pneg %p134
        %p346 = pneg %p131
        %p347 = pneg %p155
        %p348 = pneg %p152
        %p349 = pneg %p176
        %p350 = pneg %p173
        %p351 = pneg %p197
        %p352 = pneg %p194
        %p353 = pneg %p223
        %p354 = pneg %p220
        %s355 = sand.u32 %s210, 1
        %s356 = scalar_lea.sflag [#allocation4], %s355
        %s357 = sand.u32 %s210, 1
        %s358 = smul.addr %s357, 128
        %s359 = scalar_lea.vmem [#allocation8], %s358
        %s360 = smul.u32 16, %s24
        %p361 = scmp.lt.s32.totalorder %s360, 63
        %s362 = scalar_select %p361, %s360, 63
        %s363 = smul.addr %s362, 8
        %s364 = scalar_lea.vmem %s2, %s363
        %s365 = smul.u32 16, %s24
        %s366 = smul.u32 16, %s24
        %p367 = scmp.lt.s32.totalorder %s366, 63
        %s368 = scalar_select %p367, %s366, 63
        %s369 = smul.addr %s368, 8
        %s370 = scalar_lea.vmem %s3, %s369
        %s371 = smul.u32 16, %s24
        %s372 = smul.u32 16, %s24
        %v373 = vld [vmem:[%s0] sm:$0xff]
        %v374 = vld [vmem:[%s364] sm:$0xff]
        %v375 = vld [vmem:[%s364 + $0x8] sm:$0xff]
        %v376 = vld [vmem:[%s364 + $0x10] sm:$0xff]
        %v377 = vld [vmem:[%s364 + $0x18] sm:$0xff]
        %v378 = vld [vmem:[%s364 + $0x20] sm:$0xff]
        %v379 = vld [vmem:[%s364 + $0x28] sm:$0xff]
        %v380 = vld [vmem:[%s364 + $0x30] sm:$0xff]
        %v381 = vld [vmem:[%s364 + $0x38] sm:$0xff]
        %v382 = vld [vmem:[%s364 + $0x40] sm:$0xff]
        %v383 = vld [vmem:[%s364 + $0x48] sm:$0xff]
        %v384 = vld [vmem:[%s364 + $0x50] sm:$0xff]
        %v385 = vld [vmem:[%s364 + $0x58] sm:$0xff]
        %v386 = vld [vmem:[%s364 + $0x60] sm:$0xff]
        %v387 = vld [vmem:[%s364 + $0x68] sm:$0xff]
        %v388 = vld [vmem:[%s364 + $0x70] sm:$0xff]
        %v389 = vld [vmem:[%s364 + $0x78] sm:$0xff]
        %391 = vset.pattern.permute.xlu0 0
        %392 = vperm.xlu0 %391, %v374
        %v393 = vpop.permute.xlu0 %392
        %396 = vset.pattern.permute.xlu0 0
        %397 = vperm.xlu0 %396, %v375
        %v398 = vpop.permute.xlu0 %397
        %401 = vset.pattern.permute.xlu0 0
        %402 = vperm.xlu0 %401, %v376
        %v403 = vpop.permute.xlu0 %402
        %406 = vset.pattern.permute.xlu0 0
        %407 = vperm.xlu0 %406, %v377
        %v408 = vpop.permute.xlu0 %407
        %411 = vset.pattern.permute.xlu0 0
        %412 = vperm.xlu0 %411, %v378
        %v413 = vpop.permute.xlu0 %412
        %416 = vset.pattern.permute.xlu0 0
        %417 = vperm.xlu0 %416, %v379
        %v418 = vpop.permute.xlu0 %417
        %421 = vset.pattern.permute.xlu0 0
        %422 = vperm.xlu0 %421, %v380
        %v423 = vpop.permute.xlu0 %422
        %426 = vset.pattern.permute.xlu0 0
        %427 = vperm.xlu0 %426, %v381
        %v428 = vpop.permute.xlu0 %427
        %431 = vset.pattern.permute.xlu0 0
        %432 = vperm.xlu0 %431, %v382
        %v433 = vpop.permute.xlu0 %432
        %436 = vset.pattern.permute.xlu0 0
        %437 = vperm.xlu0 %436, %v383
        %v438 = vpop.permute.xlu0 %437
        %441 = vset.pattern.permute.xlu0 0
        %442 = vperm.xlu0 %441, %v384
        %v443 = vpop.permute.xlu0 %442
        %446 = vset.pattern.permute.xlu0 0
        %447 = vperm.xlu0 %446, %v385
        %v448 = vpop.permute.xlu0 %447
        %451 = vset.pattern.permute.xlu0 0
        %452 = vperm.xlu0 %451, %v386
        %v453 = vpop.permute.xlu0 %452
        %456 = vset.pattern.permute.xlu0 0
        %457 = vperm.xlu0 %456, %v387
        %v458 = vpop.permute.xlu0 %457
        %461 = vset.pattern.permute.xlu0 0
        %462 = vperm.xlu0 %461, %v388
        %v463 = vpop.permute.xlu0 %462
        %466 = vset.pattern.permute.xlu0 0
        %467 = vperm.xlu0 %466, %v389
        %v468 = vpop.permute.xlu0 %467
        %v470 = vlaneseq
        %v471 = vshrl.u32 %v470, 7
        %v472 = vsub.s32 0, %v471
        %v473 = vrot.slane %v373, %v472
        %v474 = vsub.f32 %v393, %v473
        %v475 = vsub.f32 %v398, %v473
        %v476 = vsub.f32 %v403, %v473
        %v477 = vsub.f32 %v408, %v473
        %v478 = vsub.f32 %v413, %v473
        %v479 = vsub.f32 %v418, %v473
        %v480 = vsub.f32 %v423, %v473
        %v481 = vsub.f32 %v428, %v473
        %v482 = vsub.f32 %v433, %v473
        %v483 = vsub.f32 %v438, %v473
        %v484 = vsub.f32 %v443, %v473
        %v485 = vsub.f32 %v448, %v473
        %v486 = vsub.f32 %v453, %v473
        %v487 = vsub.f32 %v458, %v473
        %v488 = vsub.f32 %v463, %v473
        %v489 = vsub.f32 %v468, %v473
        %v490 = vmul.f32 %v474, %v474
        %v491 = vmul.f32 %v475, %v475
        %v492 = vmul.f32 %v476, %v476
        %v493 = vmul.f32 %v477, %v477
        %v494 = vmul.f32 %v478, %v478
        %v495 = vmul.f32 %v479, %v479
        %v496 = vmul.f32 %v480, %v480
        %v497 = vmul.f32 %v481, %v481
        %v498 = vmul.f32 %v482, %v482
        %v499 = vmul.f32 %v483, %v483
        %v500 = vmul.f32 %v484, %v484
        %v501 = vmul.f32 %v485, %v485
        %v502 = vmul.f32 %v486, %v486
        %v503 = vmul.f32 %v487, %v487
        %v504 = vmul.f32 %v488, %v488
        %v505 = vmul.f32 %v489, %v489
        %v506 = vadd.f32 %v490, 0.0
        %v507 = vadd.f32 %v491, 0.0
        %v508 = vadd.f32 %v492, 0.0
        %v509 = vadd.f32 %v493, 0.0
        %v510 = vadd.f32 %v494, 0.0
        %v511 = vadd.f32 %v495, 0.0
        %v512 = vadd.f32 %v496, 0.0
        %v513 = vadd.f32 %v497, 0.0
        %v514 = vadd.f32 %v498, 0.0
        %v515 = vadd.f32 %v499, 0.0
        %v516 = vadd.f32 %v500, 0.0
        %v517 = vadd.f32 %v501, 0.0
        %v518 = vadd.f32 %v502, 0.0
        %v519 = vadd.f32 %v503, 0.0
        %v520 = vadd.f32 %v504, 0.0
        %v521 = vadd.f32 %v505, 0.0
        %522 = vset.pattern.permute.xlu0 1
        %523 = vperm.xlu0 %522, %v374
        %v524 = vpop.permute.xlu0 %523
        %526 = vset.pattern.permute.xlu0 1
        %527 = vperm.xlu0 %526, %v375
        %v528 = vpop.permute.xlu0 %527
        %530 = vset.pattern.permute.xlu0 1
        %531 = vperm.xlu0 %530, %v376
        %v532 = vpop.permute.xlu0 %531
        %534 = vset.pattern.permute.xlu0 1
        %535 = vperm.xlu0 %534, %v377
        %v536 = vpop.permute.xlu0 %535
        %538 = vset.pattern.permute.xlu0 1
        %539 = vperm.xlu0 %538, %v378
        %v540 = vpop.permute.xlu0 %539
        %542 = vset.pattern.permute.xlu0 1
        %543 = vperm.xlu0 %542, %v379
        %v544 = vpop.permute.xlu0 %543
        %546 = vset.pattern.permute.xlu0 1
        %547 = vperm.xlu0 %546, %v380
        %v548 = vpop.permute.xlu0 %547
        %550 = vset.pattern.permute.xlu0 1
        %551 = vperm.xlu0 %550, %v381
        %v552 = vpop.permute.xlu0 %551
        %554 = vset.pattern.permute.xlu0 1
        %555 = vperm.xlu0 %554, %v382
        %v556 = vpop.permute.xlu0 %555
        %558 = vset.pattern.permute.xlu0 1
        %559 = vperm.xlu0 %558, %v383
        %v560 = vpop.permute.xlu0 %559
        %562 = vset.pattern.permute.xlu0 1
        %563 = vperm.xlu0 %562, %v384
        %v564 = vpop.permute.xlu0 %563
        %566 = vset.pattern.permute.xlu0 1
        %567 = vperm.xlu0 %566, %v385
        %v568 = vpop.permute.xlu0 %567
        %570 = vset.pattern.permute.xlu0 1
        %571 = vperm.xlu0 %570, %v386
        %v572 = vpop.permute.xlu0 %571
        %574 = vset.pattern.permute.xlu0 1
        %575 = vperm.xlu0 %574, %v387
        %v576 = vpop.permute.xlu0 %575
        %578 = vset.pattern.permute.xlu0 1
        %579 = vperm.xlu0 %578, %v388
        %v580 = vpop.permute.xlu0 %579
        %582 = vset.pattern.permute.xlu0 1
        %583 = vperm.xlu0 %582, %v389
        %v584 = vpop.permute.xlu0 %583
        %v586 = vlaneseq
        %v587 = vshrl.u32 %v586, 7
        %v588 = vsub.s32 1, %v587
        %v589 = vrot.slane %v373, %v588
        %v590 = vsub.f32 %v524, %v589
        %v591 = vsub.f32 %v528, %v589
        %v592 = vsub.f32 %v532, %v589
        %v593 = vsub.f32 %v536, %v589
        %v594 = vsub.f32 %v540, %v589
        %v595 = vsub.f32 %v544, %v589
        %v596 = vsub.f32 %v548, %v589
        %v597 = vsub.f32 %v552, %v589
        %v598 = vsub.f32 %v556, %v589
        %v599 = vsub.f32 %v560, %v589
        %v600 = vsub.f32 %v564, %v589
        %v601 = vsub.f32 %v568, %v589
        %v602 = vsub.f32 %v572, %v589
        %v603 = vsub.f32 %v576, %v589
        %v604 = vsub.f32 %v580, %v589
        %v605 = vsub.f32 %v584, %v589
        %v606 = vmul.f32 %v590, %v590
        %v607 = vmul.f32 %v591, %v591
        %v608 = vmul.f32 %v592, %v592
        %v609 = vmul.f32 %v593, %v593
        %v610 = vmul.f32 %v594, %v594
        %v611 = vmul.f32 %v595, %v595
        %v612 = vmul.f32 %v596, %v596
        %v613 = vmul.f32 %v597, %v597
        %v614 = vmul.f32 %v598, %v598
        %v615 = vmul.f32 %v599, %v599
        %v616 = vmul.f32 %v600, %v600
        %v617 = vmul.f32 %v601, %v601
        %v618 = vmul.f32 %v602, %v602
        %v619 = vmul.f32 %v603, %v603
        %v620 = vmul.f32 %v604, %v604
        %v621 = vmul.f32 %v605, %v605
        %v622 = vadd.f32 %v506, %v606
        %v623 = vadd.f32 %v507, %v607
        %v624 = vadd.f32 %v508, %v608
        %v625 = vadd.f32 %v509, %v609
        %v626 = vadd.f32 %v510, %v610
        %v627 = vadd.f32 %v511, %v611
        %v628 = vadd.f32 %v512, %v612
        %v629 = vadd.f32 %v513, %v613
        %v630 = vadd.f32 %v514, %v614
        %v631 = vadd.f32 %v515, %v615
        %v632 = vadd.f32 %v516, %v616
        %v633 = vadd.f32 %v517, %v617
        %v634 = vadd.f32 %v518, %v618
        %v635 = vadd.f32 %v519, %v619
        %v636 = vadd.f32 %v520, %v620
        %v637 = vadd.f32 %v521, %v621
        %638 = vset.pattern.permute.xlu0 2
        %639 = vperm.xlu0 %638, %v374
        %v640 = vpop.permute.xlu0 %639
        %642 = vset.pattern.permute.xlu0 2
        %643 = vperm.xlu0 %642, %v375
        %v644 = vpop.permute.xlu0 %643
        %646 = vset.pattern.permute.xlu0 2
        %647 = vperm.xlu0 %646, %v376
        %v648 = vpop.permute.xlu0 %647
        %650 = vset.pattern.permute.xlu0 2
        %651 = vperm.xlu0 %650, %v377
        %v652 = vpop.permute.xlu0 %651
        %654 = vset.pattern.permute.xlu0 2
        %655 = vperm.xlu0 %654, %v378
        %v656 = vpop.permute.xlu0 %655
        %658 = vset.pattern.permute.xlu0 2
        %659 = vperm.xlu0 %658, %v379
        %v660 = vpop.permute.xlu0 %659
        %662 = vset.pattern.permute.xlu0 2
        %663 = vperm.xlu0 %662, %v380
        %v664 = vpop.permute.xlu0 %663
        %666 = vset.pattern.permute.xlu0 2
        %667 = vperm.xlu0 %666, %v381
        %v668 = vpop.permute.xlu0 %667
        %670 = vset.pattern.permute.xlu0 2
        %671 = vperm.xlu0 %670, %v382
        %v672 = vpop.permute.xlu0 %671
        %674 = vset.pattern.permute.xlu0 2
        %675 = vperm.xlu0 %674, %v383
        %v676 = vpop.permute.xlu0 %675
        %678 = vset.pattern.permute.xlu0 2
        %679 = vperm.xlu0 %678, %v384
        %v680 = vpop.permute.xlu0 %679
        %682 = vset.pattern.permute.xlu0 2
        %683 = vperm.xlu0 %682, %v385
        %v684 = vpop.permute.xlu0 %683
        %686 = vset.pattern.permute.xlu0 2
        %687 = vperm.xlu0 %686, %v386
        %v688 = vpop.permute.xlu0 %687
        %690 = vset.pattern.permute.xlu0 2
        %691 = vperm.xlu0 %690, %v387
        %v692 = vpop.permute.xlu0 %691
        %694 = vset.pattern.permute.xlu0 2
        %695 = vperm.xlu0 %694, %v388
        %v696 = vpop.permute.xlu0 %695
        %698 = vset.pattern.permute.xlu0 2
        %699 = vperm.xlu0 %698, %v389
        %v700 = vpop.permute.xlu0 %699
        %v702 = vlaneseq
        %v703 = vshrl.u32 %v702, 7
        %v704 = vsub.s32 2, %v703
        %v705 = vrot.slane %v373, %v704
        %v706 = vsub.f32 %v640, %v705
        %v707 = vsub.f32 %v644, %v705
        %v708 = vsub.f32 %v648, %v705
        %v709 = vsub.f32 %v652, %v705
        %v710 = vsub.f32 %v656, %v705
        %v711 = vsub.f32 %v660, %v705
        %v712 = vsub.f32 %v664, %v705
        %v713 = vsub.f32 %v668, %v705
        %v714 = vsub.f32 %v672, %v705
        %v715 = vsub.f32 %v676, %v705
        %v716 = vsub.f32 %v680, %v705
        %v717 = vsub.f32 %v684, %v705
        %v718 = vsub.f32 %v688, %v705
        %v719 = vsub.f32 %v692, %v705
        %v720 = vsub.f32 %v696, %v705
        %v721 = vsub.f32 %v700, %v705
        %v722 = vmul.f32 %v706, %v706
        %v723 = vmul.f32 %v707, %v707
        %v724 = vmul.f32 %v708, %v708
        %v725 = vmul.f32 %v709, %v709
        %v726 = vmul.f32 %v710, %v710
        %v727 = vmul.f32 %v711, %v711
        %v728 = vmul.f32 %v712, %v712
        %v729 = vmul.f32 %v713, %v713
        %v730 = vmul.f32 %v714, %v714
        %v731 = vmul.f32 %v715, %v715
        %v732 = vmul.f32 %v716, %v716
        %v733 = vmul.f32 %v717, %v717
        %v734 = vmul.f32 %v718, %v718
        %v735 = vmul.f32 %v719, %v719
        %v736 = vmul.f32 %v720, %v720
        %v737 = vmul.f32 %v721, %v721
        %v738 = vadd.f32 %v622, %v722
        %v739 = vadd.f32 %v623, %v723
        %v740 = vadd.f32 %v624, %v724
        %v741 = vadd.f32 %v625, %v725
        %v742 = vadd.f32 %v626, %v726
        %v743 = vadd.f32 %v627, %v727
        %v744 = vadd.f32 %v628, %v728
        %v745 = vadd.f32 %v629, %v729
        %v746 = vadd.f32 %v630, %v730
        %v747 = vadd.f32 %v631, %v731
        %v748 = vadd.f32 %v632, %v732
        %v749 = vadd.f32 %v633, %v733
        %v750 = vadd.f32 %v634, %v734
        %v751 = vadd.f32 %v635, %v735
        %v752 = vadd.f32 %v636, %v736
        %v753 = vadd.f32 %v637, %v737
        %754 = vset.pattern.permute.xlu0 3
        %755 = vperm.xlu0 %754, %v374
        %v756 = vpop.permute.xlu0 %755
        %758 = vset.pattern.permute.xlu0 3
        %759 = vperm.xlu0 %758, %v375
        %v760 = vpop.permute.xlu0 %759
        %762 = vset.pattern.permute.xlu0 3
        %763 = vperm.xlu0 %762, %v376
        %v764 = vpop.permute.xlu0 %763
        %766 = vset.pattern.permute.xlu0 3
        %767 = vperm.xlu0 %766, %v377
        %v768 = vpop.permute.xlu0 %767
        %770 = vset.pattern.permute.xlu0 3
        %771 = vperm.xlu0 %770, %v378
        %v772 = vpop.permute.xlu0 %771
        %774 = vset.pattern.permute.xlu0 3
        %775 = vperm.xlu0 %774, %v379
        %v776 = vpop.permute.xlu0 %775
        %778 = vset.pattern.permute.xlu0 3
        %779 = vperm.xlu0 %778, %v380
        %v780 = vpop.permute.xlu0 %779
        %782 = vset.pattern.permute.xlu0 3
        %783 = vperm.xlu0 %782, %v381
        %v784 = vpop.permute.xlu0 %783
        %786 = vset.pattern.permute.xlu0 3
        %787 = vperm.xlu0 %786, %v382
        %v788 = vpop.permute.xlu0 %787
        %790 = vset.pattern.permute.xlu0 3
        %791 = vperm.xlu0 %790, %v383
        %v792 = vpop.permute.xlu0 %791
        %794 = vset.pattern.permute.xlu0 3
        %795 = vperm.xlu0 %794, %v384
        %v796 = vpop.permute.xlu0 %795
        %798 = vset.pattern.permute.xlu0 3
        %799 = vperm.xlu0 %798, %v385
        %v800 = vpop.permute.xlu0 %799
        %802 = vset.pattern.permute.xlu0 3
        %803 = vperm.xlu0 %802, %v386
        %v804 = vpop.permute.xlu0 %803
        %806 = vset.pattern.permute.xlu0 3
        %807 = vperm.xlu0 %806, %v387
        %v808 = vpop.permute.xlu0 %807
        %810 = vset.pattern.permute.xlu0 3
        %811 = vperm.xlu0 %810, %v388
        %v812 = vpop.permute.xlu0 %811
        %814 = vset.pattern.permute.xlu0 3
        %815 = vperm.xlu0 %814, %v389
        %v816 = vpop.permute.xlu0 %815
        %v818 = vlaneseq
        %v819 = vshrl.u32 %v818, 7
        %v820 = vsub.s32 3, %v819
        %v821 = vrot.slane %v373, %v820
        %vm822 = vcmp.ne.f32.partialorder %v756, %v821
        %vm823 = vcmp.ne.f32.partialorder %v760, %v821
        %vm824 = vcmp.ne.f32.partialorder %v764, %v821
        %vm825 = vcmp.ne.f32.partialorder %v768, %v821
        %vm826 = vcmp.ne.f32.partialorder %v772, %v821
        %vm827 = vcmp.ne.f32.partialorder %v776, %v821
        %vm828 = vcmp.ne.f32.partialorder %v780, %v821
        %vm829 = vcmp.ne.f32.partialorder %v784, %v821
        %vm830 = vcmp.ne.f32.partialorder %v788, %v821
        %vm831 = vcmp.ne.f32.partialorder %v792, %v821
        %vm832 = vcmp.ne.f32.partialorder %v796, %v821
        %vm833 = vcmp.ne.f32.partialorder %v800, %v821
        %vm834 = vcmp.ne.f32.partialorder %v804, %v821
        %vm835 = vcmp.ne.f32.partialorder %v808, %v821
        %vm836 = vcmp.ne.f32.partialorder %v812, %v821
        %vm837 = vcmp.ne.f32.partialorder %v816, %v821
        %v838 = vsel %vm822, 1e+30, %v738
        %v839 = vsel %vm823, 1e+30, %v739
        %v840 = vsel %vm824, 1e+30, %v740
        %v841 = vsel %vm825, 1e+30, %v741
        %v842 = vsel %vm826, 1e+30, %v742
        %v843 = vsel %vm827, 1e+30, %v743
        %v844 = vsel %vm828, 1e+30, %v744
        %v845 = vsel %vm829, 1e+30, %v745
        %v846 = vsel %vm830, 1e+30, %v746
        %v847 = vsel %vm831, 1e+30, %v747
        %v848 = vsel %vm832, 1e+30, %v748
        %v849 = vsel %vm833, 1e+30, %v749
        %v850 = vsel %vm834, 1e+30, %v750
        %v851 = vsel %vm835, 1e+30, %v751
        %v852 = vsel %vm836, 1e+30, %v752
        %v853 = vsel %vm837, 1e+30, %v753
        %v854 = vld [vmem:[#allocation2] sm:$0xff]
        %v855 = vld [vmem:[#allocation2 + $0x8] sm:$0xff]
        %v856 = vld [vmem:[#allocation2 + $0x10] sm:$0xff]
        %v857 = vld [vmem:[#allocation2 + $0x18] sm:$0xff]
        %v858 = vld [vmem:[#allocation2 + $0x20] sm:$0xff]
        %v859 = vld [vmem:[#allocation2 + $0x28] sm:$0xff]
        %v860 = vld [vmem:[#allocation2 + $0x30] sm:$0xff]
        %v861 = vld [vmem:[#allocation2 + $0x38] sm:$0xff]
        %v862 = vld [vmem:[#allocation2 + $0x40] sm:$0xff]
        %v863 = vld [vmem:[#allocation2 + $0x48] sm:$0xff]
        %v864 = vld [vmem:[#allocation2 + $0x50] sm:$0xff]
        %v865 = vld [vmem:[#allocation2 + $0x58] sm:$0xff]
        %v866 = vld [vmem:[#allocation2 + $0x60] sm:$0xff]
        %v867 = vld [vmem:[#allocation2 + $0x68] sm:$0xff]
        %v868 = vld [vmem:[#allocation2 + $0x70] sm:$0xff]
        %v869 = vld [vmem:[#allocation2 + $0x78] sm:$0xff]
        %870 = vmin.xlane.f32.xlu0 %v838
        %v871 = vpop.xlane.xlu0 %870
        %872 = vmin.xlane.f32.xlu0 %v839
        %v873 = vpop.xlane.xlu0 %872
        %874 = vmin.xlane.f32.xlu0 %v840
        %v875 = vpop.xlane.xlu0 %874
        %876 = vmin.xlane.f32.xlu0 %v841
        %v877 = vpop.xlane.xlu0 %876
        %878 = vmin.xlane.f32.xlu0 %v842
        %v879 = vpop.xlane.xlu0 %878
        %880 = vmin.xlane.f32.xlu0 %v843
        %v881 = vpop.xlane.xlu0 %880
        %882 = vmin.xlane.f32.xlu0 %v844
        %v883 = vpop.xlane.xlu0 %882
        %884 = vmin.xlane.f32.xlu0 %v845
        %v885 = vpop.xlane.xlu0 %884
        %886 = vmin.xlane.f32.xlu0 %v846
        %v887 = vpop.xlane.xlu0 %886
        %888 = vmin.xlane.f32.xlu0 %v847
        %v889 = vpop.xlane.xlu0 %888
        %890 = vmin.xlane.f32.xlu0 %v848
        %v891 = vpop.xlane.xlu0 %890
        %892 = vmin.xlane.f32.xlu0 %v849
        %v893 = vpop.xlane.xlu0 %892
        %894 = vmin.xlane.f32.xlu0 %v850
        %v895 = vpop.xlane.xlu0 %894
        %896 = vmin.xlane.f32.xlu0 %v851
        %v897 = vpop.xlane.xlu0 %896
        %898 = vmin.xlane.f32.xlu0 %v852
        %v899 = vpop.xlane.xlu0 %898
        %900 = vmin.xlane.f32.xlu0 %v853
        %v901 = vpop.xlane.xlu0 %900
        %v902 = vmax.f32 %v871, 1e-16
        %v903 = vmax.f32 %v873, 1e-16
        %v904 = vmax.f32 %v875, 1e-16
        %v905 = vmax.f32 %v877, 1e-16
        %v906 = vmax.f32 %v879, 1e-16
        %v907 = vmax.f32 %v881, 1e-16
        %v908 = vmax.f32 %v883, 1e-16
        %v909 = vmax.f32 %v885, 1e-16
        %v910 = vmax.f32 %v887, 1e-16
        %v911 = vmax.f32 %v889, 1e-16
        %v912 = vmax.f32 %v891, 1e-16
        %v913 = vmax.f32 %v893, 1e-16
        %v914 = vmax.f32 %v895, 1e-16
        %v915 = vmax.f32 %v897, 1e-16
        %v916 = vmax.f32 %v899, 1e-16
        %v917 = vmax.f32 %v901, 1e-16
        %v918 = vrcp.pop %v902
        %v919 = vrcp.pop %v903
        %v920 = vrcp.pop %v904
        %v921 = vrcp.pop %v905
        %v922 = vrcp.pop %v906
        %v923 = vrcp.pop %v907
        %v924 = vrcp.pop %v908
        %v925 = vrcp.pop %v909
        %v926 = vrcp.pop %v910
        %v927 = vrcp.pop %v911
        %v928 = vrcp.pop %v912
        %v929 = vrcp.pop %v913
        %v930 = vrcp.pop %v914
        %v931 = vrcp.pop %v915
        %v932 = vrcp.pop %v916
        %v933 = vrcp.pop %v917
        %vm934 = vcmp.eq.f32.partialorder %v838, %v871
        %vm935 = vcmp.eq.f32.partialorder %v839, %v873
        %vm936 = vcmp.eq.f32.partialorder %v840, %v875
        %vm937 = vcmp.eq.f32.partialorder %v841, %v877
        %vm938 = vcmp.eq.f32.partialorder %v842, %v879
        %vm939 = vcmp.eq.f32.partialorder %v843, %v881
        %vm940 = vcmp.eq.f32.partialorder %v844, %v883
        %vm941 = vcmp.eq.f32.partialorder %v845, %v885
        %vm942 = vcmp.eq.f32.partialorder %v846, %v887
        %vm943 = vcmp.eq.f32.partialorder %v847, %v889
        %vm944 = vcmp.eq.f32.partialorder %v848, %v891
        %vm945 = vcmp.eq.f32.partialorder %v849, %v893
        %vm946 = vcmp.eq.f32.partialorder %v850, %v895
        %vm947 = vcmp.eq.f32.partialorder %v851, %v897
        %vm948 = vcmp.eq.f32.partialorder %v852, %v899
        %vm949 = vcmp.eq.f32.partialorder %v853, %v901
        %v950 = vsel %vm934, %v918, 0.0
        %v951 = vsel %vm935, %v919, 0.0
        %v952 = vsel %vm936, %v920, 0.0
        %v953 = vsel %vm937, %v921, 0.0
        %v954 = vsel %vm938, %v922, 0.0
        %v955 = vsel %vm939, %v923, 0.0
        %v956 = vsel %vm940, %v924, 0.0
        %v957 = vsel %vm941, %v925, 0.0
        %v958 = vsel %vm942, %v926, 0.0
        %v959 = vsel %vm943, %v927, 0.0
        %v960 = vsel %vm944, %v928, 0.0
        %v961 = vsel %vm945, %v929, 0.0
        %v962 = vsel %vm946, %v930, 0.0
        %v963 = vsel %vm947, %v931, 0.0
        %v964 = vsel %vm948, %v932, 0.0
        %v965 = vsel %vm949, %v933, 0.0
        %v966 = vsel %vm934, 1e+30, %v838
        %v967 = vsel %vm935, 1e+30, %v839
        %v968 = vsel %vm936, 1e+30, %v840
        %v969 = vsel %vm937, 1e+30, %v841
        %v970 = vsel %vm938, 1e+30, %v842
        %v971 = vsel %vm939, 1e+30, %v843
        %v972 = vsel %vm940, 1e+30, %v844
        %v973 = vsel %vm941, 1e+30, %v845
        %v974 = vsel %vm942, 1e+30, %v846
        %v975 = vsel %vm943, 1e+30, %v847
        %v976 = vsel %vm944, 1e+30, %v848
        %v977 = vsel %vm945, 1e+30, %v849
        %v978 = vsel %vm946, 1e+30, %v850
        %v979 = vsel %vm947, 1e+30, %v851
        %v980 = vsel %vm948, 1e+30, %v852
        %v981 = vsel %vm949, 1e+30, %v853
        %982 = vmin.xlane.f32.xlu0 %v966
        %v983 = vpop.xlane.xlu0 %982
        %984 = vmin.xlane.f32.xlu0 %v967
        %v985 = vpop.xlane.xlu0 %984
        %986 = vmin.xlane.f32.xlu0 %v968
        %v987 = vpop.xlane.xlu0 %986
        %988 = vmin.xlane.f32.xlu0 %v969
        %v989 = vpop.xlane.xlu0 %988
        %990 = vmin.xlane.f32.xlu0 %v970
        %v991 = vpop.xlane.xlu0 %990
        %992 = vmin.xlane.f32.xlu0 %v971
        %v993 = vpop.xlane.xlu0 %992
        %994 = vmin.xlane.f32.xlu0 %v972
        %v995 = vpop.xlane.xlu0 %994
        %996 = vmin.xlane.f32.xlu0 %v973
        %v997 = vpop.xlane.xlu0 %996
        %998 = vmin.xlane.f32.xlu0 %v974
        %v999 = vpop.xlane.xlu0 %998
        %1000 = vmin.xlane.f32.xlu0 %v975
        %v1001 = vpop.xlane.xlu0 %1000
        %1002 = vmin.xlane.f32.xlu0 %v976
        %v1003 = vpop.xlane.xlu0 %1002
        %1004 = vmin.xlane.f32.xlu0 %v977
        %v1005 = vpop.xlane.xlu0 %1004
        %1006 = vmin.xlane.f32.xlu0 %v978
        %v1007 = vpop.xlane.xlu0 %1006
        %1008 = vmin.xlane.f32.xlu0 %v979
        %v1009 = vpop.xlane.xlu0 %1008
        %1010 = vmin.xlane.f32.xlu0 %v980
        %v1011 = vpop.xlane.xlu0 %1010
        %1012 = vmin.xlane.f32.xlu0 %v981
        %v1013 = vpop.xlane.xlu0 %1012
        %v1014 = vmax.f32 %v983, 1e-16
        %v1015 = vmax.f32 %v985, 1e-16
        %v1016 = vmax.f32 %v987, 1e-16
        %v1017 = vmax.f32 %v989, 1e-16
        %v1018 = vmax.f32 %v991, 1e-16
        %v1019 = vmax.f32 %v993, 1e-16
        %v1020 = vmax.f32 %v995, 1e-16
        %v1021 = vmax.f32 %v997, 1e-16
        %v1022 = vmax.f32 %v999, 1e-16
        %v1023 = vmax.f32 %v1001, 1e-16
        %v1024 = vmax.f32 %v1003, 1e-16
        %v1025 = vmax.f32 %v1005, 1e-16
        %v1026 = vmax.f32 %v1007, 1e-16
        %v1027 = vmax.f32 %v1009, 1e-16
        %v1028 = vmax.f32 %v1011, 1e-16
        %v1029 = vmax.f32 %v1013, 1e-16
        %v1030 = vrcp.pop %v1014
        %v1031 = vrcp.pop %v1015
        %v1032 = vrcp.pop %v1016
        %v1033 = vrcp.pop %v1017
        %v1034 = vrcp.pop %v1018
        %v1035 = vrcp.pop %v1019
        %v1036 = vrcp.pop %v1020
        %v1037 = vrcp.pop %v1021
        %v1038 = vrcp.pop %v1022
        %v1039 = vrcp.pop %v1023
        %v1040 = vrcp.pop %v1024
        %v1041 = vrcp.pop %v1025
        %v1042 = vrcp.pop %v1026
        %v1043 = vrcp.pop %v1027
        %v1044 = vrcp.pop %v1028
        %v1045 = vrcp.pop %v1029
        %vm1046 = vcmp.eq.f32.partialorder %v966, %v983
        %vm1047 = vcmp.eq.f32.partialorder %v967, %v985
        %vm1048 = vcmp.eq.f32.partialorder %v968, %v987
        %vm1049 = vcmp.eq.f32.partialorder %v969, %v989
        %vm1050 = vcmp.eq.f32.partialorder %v970, %v991
        %vm1051 = vcmp.eq.f32.partialorder %v971, %v993
        %vm1052 = vcmp.eq.f32.partialorder %v972, %v995
        %vm1053 = vcmp.eq.f32.partialorder %v973, %v997
        %vm1054 = vcmp.eq.f32.partialorder %v974, %v999
        %vm1055 = vcmp.eq.f32.partialorder %v975, %v1001
        %vm1056 = vcmp.eq.f32.partialorder %v976, %v1003
        %vm1057 = vcmp.eq.f32.partialorder %v977, %v1005
        %vm1058 = vcmp.eq.f32.partialorder %v978, %v1007
        %vm1059 = vcmp.eq.f32.partialorder %v979, %v1009
        %vm1060 = vcmp.eq.f32.partialorder %v980, %v1011
        %vm1061 = vcmp.eq.f32.partialorder %v981, %v1013
        %v1062 = vsel %vm1046, %v1030, 0.0
        %v1063 = vsel %vm1047, %v1031, 0.0
        %v1064 = vsel %vm1048, %v1032, 0.0
        %v1065 = vsel %vm1049, %v1033, 0.0
        %v1066 = vsel %vm1050, %v1034, 0.0
        %v1067 = vsel %vm1051, %v1035, 0.0
        %v1068 = vsel %vm1052, %v1036, 0.0
        %v1069 = vsel %vm1053, %v1037, 0.0
        %v1070 = vsel %vm1054, %v1038, 0.0
        %v1071 = vsel %vm1055, %v1039, 0.0
        %v1072 = vsel %vm1056, %v1040, 0.0
        %v1073 = vsel %vm1057, %v1041, 0.0
        %v1074 = vsel %vm1058, %v1042, 0.0
        %v1075 = vsel %vm1059, %v1043, 0.0
        %v1076 = vsel %vm1060, %v1044, 0.0
        %v1077 = vsel %vm1061, %v1045, 0.0
        %1078 = vmatprep.subr.mxu0 0.0
        %1079 = vmatpush1.msra.mxu0 %v854
        %1080 = vmatprep.subr.mxu0 0.0
        %1081 = vmatpush1.msra.mxu0 %v855
        %1082 = vmatprep.subr.mxu0 0.0
        %1083 = vmatpush1.msra.mxu0 %v856
        %1084 = vmatprep.subr.mxu0 0.0
        %1085 = vmatpush1.msra.mxu0 %v857
        %1086 = vmatprep.subr.mxu0 0.0
        %1087 = vmatpush1.msra.mxu0 %v858
        %1088 = vmatprep.subr.mxu0 0.0
        %1089 = vmatpush1.msra.mxu0 %v859
        %1090 = vmatprep.subr.mxu0 0.0
        %1091 = vmatpush1.msra.mxu0 %v860
        %1092 = vmatprep.subr.mxu0 0.0
        %1093 = vmatpush1.msra.mxu0 %v861
        %1094 = vmatprep.subr.mxu0 0.0
        %1095 = vmatpush1.msra.mxu0 %v862
        %1096 = vmatprep.subr.mxu0 0.0
        %1097 = vmatpush1.msra.mxu0 %v863
        %1098 = vmatprep.subr.mxu0 0.0
        %1099 = vmatpush1.msra.mxu0 %v864
        %1100 = vmatprep.subr.mxu0 0.0
        %1101 = vmatpush1.msra.mxu0 %v865
        %1102 = vmatprep.subr.mxu0 0.0
        %1103 = vmatpush1.msra.mxu0 %v866
        %1104 = vmatprep.subr.mxu0 0.0
        %1105 = vmatpush1.msra.mxu0 %v867
        %1106 = vmatprep.subr.mxu0 0.0
        %1107 = vmatpush1.msra.mxu0 %v868
        %1108 = vmatprep.subr.mxu0 0.0
        %1109 = vmatpush1.msra.mxu0 %v869
        %1110 = vmatprep.subr.mxu0 0.0
        %1111 = vmatpush1.msra.mxu0 0.0
        %1112 = vmatprep.subr.mxu0 0.0
        %1113 = vmatpush1.msra.mxu0 0.0
        %1114 = vmatprep.subr.mxu0 0.0
        %1115 = vmatpush1.msra.mxu0 0.0
        %1116 = vmatprep.subr.mxu0 0.0
        %1117 = vmatpush1.msra.mxu0 0.0
        %1118 = vmatprep.subr.mxu0 0.0
        %1119 = vmatpush1.msra.mxu0 0.0
        %1120 = vmatprep.subr.mxu0 0.0
        %1121 = vmatpush1.msra.mxu0 0.0
        %1122 = vmatprep.subr.mxu0 0.0
        %1123 = vmatpush1.msra.mxu0 0.0
        %1124 = vmatprep.subr.mxu0 0.0
        %1125 = vmatpush1.msra.mxu0 0.0
        %1126 = vmatprep.subr.mxu0 0.0
        %1127 = vmatpush1.msra.mxu0 0.0
        %1128 = vmatprep.subr.mxu0 0.0
        %1129 = vmatpush1.msra.mxu0 0.0
        %1130 = vmatprep.subr.mxu0 0.0
        %1131 = vmatpush1.msra.mxu0 0.0
        %1132 = vmatprep.subr.mxu0 0.0
        %1133 = vmatpush1.msra.mxu0 0.0
        %1134 = vmatprep.subr.mxu0 0.0
        %1135 = vmatpush1.msra.mxu0 0.0
        %1136 = vmatprep.subr.mxu0 0.0
        %1137 = vmatpush1.msra.mxu0 0.0
        %1138 = vmatprep.subr.mxu0 0.0
        %1139 = vmatpush1.msra.mxu0 0.0
        %1140 = vmatprep.subr.mxu0 0.0
        %1141 = vmatpush1.msra.mxu0 0.0
        %1142 = vmatprep.mubr.f32.mxu0 0.0
        %1143 = vmatmul.mubr.f32.gmra.mrb[0].mxu0 %v1062
        %v1144 = vpop.f32.mrb[0].mxu0
        %v1145 = vadd.f32 0.0, %v1144
        %v1146 = vpop.f32.mrb[0].mxu0
        %1147 = vmatprep.mubr.f32.mxu0 0.0
        %1148 = vmatmul.mubr.f32.gmra.mrb[0].mxu0 %v1063
        %v1149 = vpop.f32.mrb[0].mxu0
        %v1150 = vadd.f32 0.0, %v1149
        %v1151 = vpop.f32.mrb[0].mxu0
        %1152 = vmatprep.mubr.f32.mxu0 0.0
        %1153 = vmatmul.mubr.f32.gmra.mrb[0].mxu0 %v1064
        %v1154 = vpop.f32.mrb[0].mxu0
        %v1155 = vadd.f32 0.0, %v1154
        %v1156 = vpop.f32.mrb[0].mxu0
        %1157 = vmatprep.mubr.f32.mxu0 0.0
        %1158 = vmatmul.mubr.f32.gmra.mrb[0].mxu0 %v1065
        %v1159 = vpop.f32.mrb[0].mxu0
        %v1160 = vadd.f32 0.0, %v1159
        %v1161 = vpop.f32.mrb[0].mxu0
        %1162 = vmatprep.mubr.f32.mxu0 0.0
        %1163 = vmatmul.mubr.f32.gmra.mrb[0].mxu0 %v1066
        %v1164 = vpop.f32.mrb[0].mxu0
        %v1165 = vadd.f32 0.0, %v1164
        %v1166 = vpop.f32.mrb[0].mxu0
        %1167 = vmatprep.mubr.f32.mxu0 0.0
        %1168 = vmatmul.mubr.f32.gmra.mrb[0].mxu0 %v1067
        %v1169 = vpop.f32.mrb[0].mxu0
        %v1170 = vadd.f32 0.0, %v1169
        %v1171 = vpop.f32.mrb[0].mxu0
        %1172 = vmatprep.mubr.f32.mxu0 0.0
        %1173 = vmatmul.mubr.f32.gmra.mrb[0].mxu0 %v1068
        %v1174 = vpop.f32.mrb[0].mxu0
        %v1175 = vadd.f32 0.0, %v1174
        %v1176 = vpop.f32.mrb[0].mxu0
        %1177 = vmatprep.mubr.f32.mxu0 0.0
        %1178 = vmatmul.mubr.f32.gmra.mrb[0].mxu0 %v1069
        %v1179 = vpop.f32.mrb[0].mxu0
        %v1180 = vadd.f32 0.0, %v1179
        %v1181 = vpop.f32.mrb[0].mxu0
        %1182 = vmatprep.mubr.f32.mxu0 0.0
        %1183 = vmatmul.mubr.f32.gmra.mrb[0].mxu0 %v1070
        %v1184 = vpop.f32.mrb[0].mxu0
        %v1185 = vadd.f32 0.0, %v1184
        %v1186 = vpop.f32.mrb[0].mxu0
        %1187 = vmatprep.mubr.f32.mxu0 0.0
        %1188 = vmatmul.mubr.f32.gmra.mrb[0].mxu0 %v1071
        %v1189 = vpop.f32.mrb[0].mxu0
        %v1190 = vadd.f32 0.0, %v1189
        %v1191 = vpop.f32.mrb[0].mxu0
        %1192 = vmatprep.mubr.f32.mxu0 0.0
        %1193 = vmatmul.mubr.f32.gmra.mrb[0].mxu0 %v1072
        %v1194 = vpop.f32.mrb[0].mxu0
        %v1195 = vadd.f32 0.0, %v1194
        %v1196 = vpop.f32.mrb[0].mxu0
        %1197 = vmatprep.mubr.f32.mxu0 0.0
        %1198 = vmatmul.mubr.f32.gmra.mrb[0].mxu0 %v1073
        %v1199 = vpop.f32.mrb[0].mxu0
        %v1200 = vadd.f32 0.0, %v1199
        %v1201 = vpop.f32.mrb[0].mxu0
        %1202 = vmatprep.mubr.f32.mxu0 0.0
        %1203 = vmatmul.mubr.f32.gmra.mrb[0].mxu0 %v1074
        %v1204 = vpop.f32.mrb[0].mxu0
        %v1205 = vadd.f32 0.0, %v1204
        %v1206 = vpop.f32.mrb[0].mxu0
        %1207 = vmatprep.mubr.f32.mxu0 0.0
        %1208 = vmatmul.mubr.f32.gmra.mrb[0].mxu0 %v1075
        %v1209 = vpop.f32.mrb[0].mxu0
        %v1210 = vadd.f32 0.0, %v1209
        %v1211 = vpop.f32.mrb[0].mxu0
        %1212 = vmatprep.mubr.f32.mxu0 0.0
        %1213 = vmatmul.mubr.f32.gmra.mrb[0].mxu0 %v1076
        %v1214 = vpop.f32.mrb[0].mxu0
        %v1215 = vadd.f32 0.0, %v1214
        %v1216 = vpop.f32.mrb[0].mxu0
        %1217 = vmatprep.mubr.f32.mxu0 0.0
        %1218 = vmatmul.mubr.f32.gmra.mrb[0].mxu0 %v1077
        %v1219 = vpop.f32.mrb[0].mxu0
        %v1220 = vadd.f32 0.0, %v1219
        %v1221 = vpop.f32.mrb[0].mxu0
        %1222 = vdwg.mxu0
        %1223 = vmatprep.subr.mxu0 0.0
        %1224 = vmatpush1.msra.mxu0 %v854
        %1225 = vmatprep.subr.mxu0 0.0
        %1226 = vmatpush1.msra.mxu0 %v855
        %1227 = vmatprep.subr.mxu0 0.0
        %1228 = vmatpush1.msra.mxu0 %v856
        %1229 = vmatprep.subr.mxu0 0.0
        %1230 = vmatpush1.msra.mxu0 %v857
        %1231 = vmatprep.subr.mxu0 0.0
        %1232 = vmatpush1.msra.mxu0 %v858
        %1233 = vmatprep.subr.mxu0 0.0
        %1234 = vmatpush1.msra.mxu0 %v859
        %1235 = vmatprep.subr.mxu0 0.0
        %1236 = vmatpush1.msra.mxu0 %v860
        %1237 = vmatprep.subr.mxu0 0.0
        %1238 = vmatpush1.msra.mxu0 %v861
        %1239 = vmatprep.subr.mxu0 0.0
        %1240 = vmatpush1.msra.mxu0 %v862
        %1241 = vmatprep.subr.mxu0 0.0
        %1242 = vmatpush1.msra.mxu0 %v863
        %1243 = vmatprep.subr.mxu0 0.0
        %1244 = vmatpush1.msra.mxu0 %v864
        %1245 = vmatprep.subr.mxu0 0.0
        %1246 = vmatpush1.msra.mxu0 %v865
        %1247 = vmatprep.subr.mxu0 0.0
        %1248 = vmatpush1.msra.mxu0 %v866
        %1249 = vmatprep.subr.mxu0 0.0
        %1250 = vmatpush1.msra.mxu0 %v867
        %1251 = vmatprep.subr.mxu0 0.0
        %1252 = vmatpush1.msra.mxu0 %v868
        %1253 = vmatprep.subr.mxu0 0.0
        %1254 = vmatpush1.msra.mxu0 %v869
        %1255 = vmatprep.subr.mxu0 0.0
        %1256 = vmatpush1.msra.mxu0 0.0
        %1257 = vmatprep.subr.mxu0 0.0
        %1258 = vmatpush1.msra.mxu0 0.0
        %1259 = vmatprep.subr.mxu0 0.0
        %1260 = vmatpush1.msra.mxu0 0.0
        %1261 = vmatprep.subr.mxu0 0.0
        %1262 = vmatpush1.msra.mxu0 0.0
        %1263 = vmatprep.subr.mxu0 0.0
        %1264 = vmatpush1.msra.mxu0 0.0
        %1265 = vmatprep.subr.mxu0 0.0
        %1266 = vmatpush1.msra.mxu0 0.0
        %1267 = vmatprep.subr.mxu0 0.0
        %1268 = vmatpush1.msra.mxu0 0.0
        %1269 = vmatprep.subr.mxu0 0.0
        %1270 = vmatpush1.msra.mxu0 0.0
        %1271 = vmatprep.subr.mxu0 0.0
        %1272 = vmatpush1.msra.mxu0 0.0
        %1273 = vmatprep.subr.mxu0 0.0
        %1274 = vmatpush1.msra.mxu0 0.0
        %1275 = vmatprep.subr.mxu0 0.0
        %1276 = vmatpush1.msra.mxu0 0.0
        %1277 = vmatprep.subr.mxu0 0.0
        %1278 = vmatpush1.msra.mxu0 0.0
        %1279 = vmatprep.subr.mxu0 0.0
        %1280 = vmatpush1.msra.mxu0 0.0
        %1281 = vmatprep.subr.mxu0 0.0
        %1282 = vmatpush1.msra.mxu0 0.0
        %1283 = vmatprep.subr.mxu0 0.0
        %1284 = vmatpush1.msra.mxu0 0.0
        %1285 = vmatprep.subr.mxu0 0.0
        %1286 = vmatpush1.msra.mxu0 0.0
        %1287 = vmatprep.mubr.f32.mxu0 0.0
        %1288 = vmatmul.mubr.f32.gmra.mrb[0].mxu0 %v950
        %v1289 = vpop.f32.mrb[0].mxu0
        %v1290 = vadd.f32 %v1145, %v1289
        %v1291 = vpop.f32.mrb[0].mxu0
        %1292 = vmatprep.mubr.f32.mxu0 0.0
        %1293 = vmatmul.mubr.f32.gmra.mrb[0].mxu0 %v951
        %v1294 = vpop.f32.mrb[0].mxu0
        %v1295 = vadd.f32 %v1150, %v1294
        %v1296 = vpop.f32.mrb[0].mxu0
        %1297 = vmatprep.mubr.f32.mxu0 0.0
        %1298 = vmatmul.mubr.f32.gmra.mrb[0].mxu0 %v952
        %v1299 = vpop.f32.mrb[0].mxu0
        %v1300 = vadd.f32 %v1155, %v1299
        %v1301 = vpop.f32.mrb[0].mxu0
        %1302 = vmatprep.mubr.f32.mxu0 0.0
        %1303 = vmatmul.mubr.f32.gmra.mrb[0].mxu0 %v953
        %v1304 = vpop.f32.mrb[0].mxu0
        %v1305 = vadd.f32 %v1160, %v1304
        %v1306 = vpop.f32.mrb[0].mxu0
        %1307 = vmatprep.mubr.f32.mxu0 0.0
        %1308 = vmatmul.mubr.f32.gmra.mrb[0].mxu0 %v954
        %v1309 = vpop.f32.mrb[0].mxu0
        %v1310 = vadd.f32 %v1165, %v1309
        %v1311 = vpop.f32.mrb[0].mxu0
        %1312 = vmatprep.mubr.f32.mxu0 0.0
        %1313 = vmatmul.mubr.f32.gmra.mrb[0].mxu0 %v955
        %v1314 = vpop.f32.mrb[0].mxu0
        %v1315 = vadd.f32 %v1170, %v1314
        %v1316 = vpop.f32.mrb[0].mxu0
        %1317 = vmatprep.mubr.f32.mxu0 0.0
        %1318 = vmatmul.mubr.f32.gmra.mrb[0].mxu0 %v956
        %v1319 = vpop.f32.mrb[0].mxu0
        %v1320 = vadd.f32 %v1175, %v1319
        %v1321 = vpop.f32.mrb[0].mxu0
        %1322 = vmatprep.mubr.f32.mxu0 0.0
        %1323 = vmatmul.mubr.f32.gmra.mrb[0].mxu0 %v957
        %v1324 = vpop.f32.mrb[0].mxu0
        %v1325 = vadd.f32 %v1180, %v1324
        %v1326 = vpop.f32.mrb[0].mxu0
        %1327 = vmatprep.mubr.f32.mxu0 0.0
        %1328 = vmatmul.mubr.f32.gmra.mrb[0].mxu0 %v958
        %v1329 = vpop.f32.mrb[0].mxu0
        %v1330 = vadd.f32 %v1185, %v1329
        %v1331 = vpop.f32.mrb[0].mxu0
        %1332 = vmatprep.mubr.f32.mxu0 0.0
        %1333 = vmatmul.mubr.f32.gmra.mrb[0].mxu0 %v959
        %v1334 = vpop.f32.mrb[0].mxu0
        %v1335 = vadd.f32 %v1190, %v1334
        %v1336 = vpop.f32.mrb[0].mxu0
        %1337 = vmatprep.mubr.f32.mxu0 0.0
        %1338 = vmatmul.mubr.f32.gmra.mrb[0].mxu0 %v960
        %v1339 = vpop.f32.mrb[0].mxu0
        %v1340 = vadd.f32 %v1195, %v1339
        %v1341 = vpop.f32.mrb[0].mxu0
        %1342 = vmatprep.mubr.f32.mxu0 0.0
        %1343 = vmatmul.mubr.f32.gmra.mrb[0].mxu0 %v961
        %v1344 = vpop.f32.mrb[0].mxu0
        %v1345 = vadd.f32 %v1200, %v1344
        %v1346 = vpop.f32.mrb[0].mxu0
        %1347 = vmatprep.mubr.f32.mxu0 0.0
        %1348 = vmatmul.mubr.f32.gmra.mrb[0].mxu0 %v962
        %v1349 = vpop.f32.mrb[0].mxu0
        %v1350 = vadd.f32 %v1205, %v1349
        %v1351 = vpop.f32.mrb[0].mxu0
        %1352 = vmatprep.mubr.f32.mxu0 0.0
        %1353 = vmatmul.mubr.f32.gmra.mrb[0].mxu0 %v963
        %v1354 = vpop.f32.mrb[0].mxu0
        %v1355 = vadd.f32 %v1210, %v1354
        %v1356 = vpop.f32.mrb[0].mxu0
        %1357 = vmatprep.mubr.f32.mxu0 0.0
        %1358 = vmatmul.mubr.f32.gmra.mrb[0].mxu0 %v964
        %v1359 = vpop.f32.mrb[0].mxu0
        %v1360 = vadd.f32 %v1215, %v1359
        %v1361 = vpop.f32.mrb[0].mxu0
        %1362 = vmatprep.mubr.f32.mxu0 0.0
        %1363 = vmatmul.mubr.f32.gmra.mrb[0].mxu0 %v965
        %v1364 = vpop.f32.mrb[0].mxu0
        %v1365 = vadd.f32 %v1220, %v1364
        %v1366 = vpop.f32.mrb[0].mxu0
        %1367 = vdwg.mxu0
        %v1368 = vsel %vm1046, 1e+30, %v966
        %v1369 = vsel %vm1047, 1e+30, %v967
        %v1370 = vsel %vm1048, 1e+30, %v968
        %v1371 = vsel %vm1049, 1e+30, %v969
        %v1372 = vsel %vm1050, 1e+30, %v970
        %v1373 = vsel %vm1051, 1e+30, %v971
        %v1374 = vsel %vm1052, 1e+30, %v972
        %v1375 = vsel %vm1053, 1e+30, %v973
        %v1376 = vsel %vm1054, 1e+30, %v974
        %v1377 = vsel %vm1055, 1e+30, %v975
        %v1378 = vsel %vm1056, 1e+30, %v976
        %v1379 = vsel %vm1057, 1e+30, %v977
        %v1380 = vsel %vm1058, 1e+30, %v978
        %v1381 = vsel %vm1059, 1e+30, %v979
        %v1382 = vsel %vm1060, 1e+30, %v980
        %v1383 = vsel %vm1061, 1e+30, %v981
        %1384 = vmin.xlane.f32.xlu0 %v1368
        %v1385 = vpop.xlane.xlu0 %1384
        %1386 = vmin.xlane.f32.xlu0 %v1369
        %v1387 = vpop.xlane.xlu0 %1386
        %1388 = vmin.xlane.f32.xlu0 %v1370
        %v1389 = vpop.xlane.xlu0 %1388
        %1390 = vmin.xlane.f32.xlu0 %v1371
        %v1391 = vpop.xlane.xlu0 %1390
        %1392 = vmin.xlane.f32.xlu0 %v1372
        %v1393 = vpop.xlane.xlu0 %1392
        %1394 = vmin.xlane.f32.xlu0 %v1373
        %v1395 = vpop.xlane.xlu0 %1394
        %1396 = vmin.xlane.f32.xlu0 %v1374
        %v1397 = vpop.xlane.xlu0 %1396
        %1398 = vmin.xlane.f32.xlu0 %v1375
        %v1399 = vpop.xlane.xlu0 %1398
        %1400 = vmin.xlane.f32.xlu0 %v1376
        %v1401 = vpop.xlane.xlu0 %1400
        %1402 = vmin.xlane.f32.xlu0 %v1377
        %v1403 = vpop.xlane.xlu0 %1402
        %1404 = vmin.xlane.f32.xlu0 %v1378
        %v1405 = vpop.xlane.xlu0 %1404
        %1406 = vmin.xlane.f32.xlu0 %v1379
        %v1407 = vpop.xlane.xlu0 %1406
        %1408 = vmin.xlane.f32.xlu0 %v1380
        %v1409 = vpop.xlane.xlu0 %1408
        %1410 = vmin.xlane.f32.xlu0 %v1381
        %v1411 = vpop.xlane.xlu0 %1410
        %1412 = vmin.xlane.f32.xlu0 %v1382
        %v1413 = vpop.xlane.xlu0 %1412
        %1414 = vmin.xlane.f32.xlu0 %v1383
        %v1415 = vpop.xlane.xlu0 %1414
        %v1416 = vmax.f32 %v1385, 1e-16
        %v1417 = vmax.f32 %v1387, 1e-16
        %v1418 = vmax.f32 %v1389, 1e-16
        %v1419 = vmax.f32 %v1391, 1e-16
        %v1420 = vmax.f32 %v1393, 1e-16
        %v1421 = vmax.f32 %v1395, 1e-16
        %v1422 = vmax.f32 %v1397, 1e-16
        %v1423 = vmax.f32 %v1399, 1e-16
        %v1424 = vmax.f32 %v1401, 1e-16
        %v1425 = vmax.f32 %v1403, 1e-16
        %v1426 = vmax.f32 %v1405, 1e-16
        %v1427 = vmax.f32 %v1407, 1e-16
        %v1428 = vmax.f32 %v1409, 1e-16
        %v1429 = vmax.f32 %v1411, 1e-16
        %v1430 = vmax.f32 %v1413, 1e-16
        %v1431 = vmax.f32 %v1415, 1e-16
        %v1432 = vrcp.pop %v1416
        %v1433 = vrcp.pop %v1417
        %v1434 = vrcp.pop %v1418
        %v1435 = vrcp.pop %v1419
        %v1436 = vrcp.pop %v1420
        %v1437 = vrcp.pop %v1421
        %v1438 = vrcp.pop %v1422
        %v1439 = vrcp.pop %v1423
        %v1440 = vrcp.pop %v1424
        %v1441 = vrcp.pop %v1425
        %v1442 = vrcp.pop %v1426
        %v1443 = vrcp.pop %v1427
        %v1444 = vrcp.pop %v1428
        %v1445 = vrcp.pop %v1429
        %v1446 = vrcp.pop %v1430
        %v1447 = vrcp.pop %v1431
        %vm1448 = vcmp.eq.f32.partialorder %v1368, %v1385
        %vm1449 = vcmp.eq.f32.partialorder %v1369, %v1387
        %vm1450 = vcmp.eq.f32.partialorder %v1370, %v1389
        %vm1451 = vcmp.eq.f32.partialorder %v1371, %v1391
        %vm1452 = vcmp.eq.f32.partialorder %v1372, %v1393
        %vm1453 = vcmp.eq.f32.partialorder %v1373, %v1395
        %vm1454 = vcmp.eq.f32.partialorder %v1374, %v1397
        %vm1455 = vcmp.eq.f32.partialorder %v1375, %v1399
        %vm1456 = vcmp.eq.f32.partialorder %v1376, %v1401
        %vm1457 = vcmp.eq.f32.partialorder %v1377, %v1403
        %vm1458 = vcmp.eq.f32.partialorder %v1378, %v1405
        %vm1459 = vcmp.eq.f32.partialorder %v1379, %v1407
        %vm1460 = vcmp.eq.f32.partialorder %v1380, %v1409
        %vm1461 = vcmp.eq.f32.partialorder %v1381, %v1411
        %vm1462 = vcmp.eq.f32.partialorder %v1382, %v1413
        %vm1463 = vcmp.eq.f32.partialorder %v1383, %v1415
        %v1464 = vsel %vm1448, %v1432, 0.0
        %v1465 = vsel %vm1449, %v1433, 0.0
        %v1466 = vsel %vm1450, %v1434, 0.0
        %v1467 = vsel %vm1451, %v1435, 0.0
        %v1468 = vsel %vm1452, %v1436, 0.0
        %v1469 = vsel %vm1453, %v1437, 0.0
        %v1470 = vsel %vm1454, %v1438, 0.0
        %v1471 = vsel %vm1455, %v1439, 0.0
        %v1472 = vsel %vm1456, %v1440, 0.0
        %v1473 = vsel %vm1457, %v1441, 0.0
        %v1474 = vsel %vm1458, %v1442, 0.0
        %v1475 = vsel %vm1459, %v1443, 0.0
        %v1476 = vsel %vm1460, %v1444, 0.0
        %v1477 = vsel %vm1461, %v1445, 0.0
        %v1478 = vsel %vm1462, %v1446, 0.0
        %v1479 = vsel %vm1463, %v1447, 0.0
        %1480 = vmatprep.subr.mxu0 0.0
        %1481 = vmatpush1.msra.mxu0 %v854
        %1482 = vmatprep.subr.mxu0 0.0
        %1483 = vmatpush1.msra.mxu0 %v855
        %1484 = vmatprep.subr.mxu0 0.0
        %1485 = vmatpush1.msra.mxu0 %v856
        %1486 = vmatprep.subr.mxu0 0.0
        %1487 = vmatpush1.msra.mxu0 %v857
        %1488 = vmatprep.subr.mxu0 0.0
        %1489 = vmatpush1.msra.mxu0 %v858
        %1490 = vmatprep.subr.mxu0 0.0
        %1491 = vmatpush1.msra.mxu0 %v859
        %1492 = vmatprep.subr.mxu0 0.0
        %1493 = vmatpush1.msra.mxu0 %v860
        %1494 = vmatprep.subr.mxu0 0.0
        %1495 = vmatpush1.msra.mxu0 %v861
        %1496 = vmatprep.subr.mxu0 0.0
        %1497 = vmatpush1.msra.mxu0 %v862
        %1498 = vmatprep.subr.mxu0 0.0
        %1499 = vmatpush1.msra.mxu0 %v863
        %1500 = vmatprep.subr.mxu0 0.0
        %1501 = vmatpush1.msra.mxu0 %v864
        %1502 = vmatprep.subr.mxu0 0.0
        %1503 = vmatpush1.msra.mxu0 %v865
        %1504 = vmatprep.subr.mxu0 0.0
        %1505 = vmatpush1.msra.mxu0 %v866
        %1506 = vmatprep.subr.mxu0 0.0
        %1507 = vmatpush1.msra.mxu0 %v867
        %1508 = vmatprep.subr.mxu0 0.0
        %1509 = vmatpush1.msra.mxu0 %v868
        %1510 = vmatprep.subr.mxu0 0.0
        %1511 = vmatpush1.msra.mxu0 %v869
        %1512 = vmatprep.subr.mxu0 0.0
        %1513 = vmatpush1.msra.mxu0 0.0
        %1514 = vmatprep.subr.mxu0 0.0
        %1515 = vmatpush1.msra.mxu0 0.0
        %1516 = vmatprep.subr.mxu0 0.0
        %1517 = vmatpush1.msra.mxu0 0.0
        %1518 = vmatprep.subr.mxu0 0.0
        %1519 = vmatpush1.msra.mxu0 0.0
        %1520 = vmatprep.subr.mxu0 0.0
        %1521 = vmatpush1.msra.mxu0 0.0
        %1522 = vmatprep.subr.mxu0 0.0
        %1523 = vmatpush1.msra.mxu0 0.0
        %1524 = vmatprep.subr.mxu0 0.0
        %1525 = vmatpush1.msra.mxu0 0.0
        %1526 = vmatprep.subr.mxu0 0.0
        %1527 = vmatpush1.msra.mxu0 0.0
        %1528 = vmatprep.subr.mxu0 0.0
        %1529 = vmatpush1.msra.mxu0 0.0
        %1530 = vmatprep.subr.mxu0 0.0
        %1531 = vmatpush1.msra.mxu0 0.0
        %1532 = vmatprep.subr.mxu0 0.0
        %1533 = vmatpush1.msra.mxu0 0.0
        %1534 = vmatprep.subr.mxu0 0.0
        %1535 = vmatpush1.msra.mxu0 0.0
        %1536 = vmatprep.subr.mxu0 0.0
        %1537 = vmatpush1.msra.mxu0 0.0
        %1538 = vmatprep.subr.mxu0 0.0
        %1539 = vmatpush1.msra.mxu0 0.0
        %1540 = vmatprep.subr.mxu0 0.0
        %1541 = vmatpush1.msra.mxu0 0.0
        %1542 = vmatprep.subr.mxu0 0.0
        %1543 = vmatpush1.msra.mxu0 0.0
        %1544 = vmatprep.mubr.f32.mxu0 0.0
        %1545 = vmatmul.mubr.f32.gmra.mrb[0].mxu0 %v1464
        %v1546 = vpop.f32.mrb[0].mxu0
        %v1547 = vadd.f32 0.0, %v1546
        %v1548 = vpop.f32.mrb[0].mxu0
        %1549 = vmatprep.mubr.f32.mxu0 0.0
        %1550 = vmatmul.mubr.f32.gmra.mrb[0].mxu0 %v1465
        %v1551 = vpop.f32.mrb[0].mxu0
        %v1552 = vadd.f32 0.0, %v1551
        %v1553 = vpop.f32.mrb[0].mxu0
        %1554 = vmatprep.mubr.f32.mxu0 0.0
        %1555 = vmatmul.mubr.f32.gmra.mrb[0].mxu0 %v1466
        %v1556 = vpop.f32.mrb[0].mxu0
        %v1557 = vadd.f32 0.0, %v1556
        %v1558 = vpop.f32.mrb[0].mxu0
        %1559 = vmatprep.mubr.f32.mxu0 0.0
        %1560 = vmatmul.mubr.f32.gmra.mrb[0].mxu0 %v1467
        %v1561 = vpop.f32.mrb[0].mxu0
        %v1562 = vadd.f32 0.0, %v1561
        %v1563 = vpop.f32.mrb[0].mxu0
        %1564 = vmatprep.mubr.f32.mxu0 0.0
        %1565 = vmatmul.mubr.f32.gmra.mrb[0].mxu0 %v1468
        %v1566 = vpop.f32.mrb[0].mxu0
        %v1567 = vadd.f32 0.0, %v1566
        %v1568 = vpop.f32.mrb[0].mxu0
        %1569 = vmatprep.mubr.f32.mxu0 0.0
        %1570 = vmatmul.mubr.f32.gmra.mrb[0].mxu0 %v1469
        %v1571 = vpop.f32.mrb[0].mxu0
        %v1572 = vadd.f32 0.0, %v1571
        %v1573 = vpop.f32.mrb[0].mxu0
        %1574 = vmatprep.mubr.f32.mxu0 0.0
        %1575 = vmatmul.mubr.f32.gmra.mrb[0].mxu0 %v1470
        %v1576 = vpop.f32.mrb[0].mxu0
        %v1577 = vadd.f32 0.0, %v1576
        %v1578 = vpop.f32.mrb[0].mxu0
        %1579 = vmatprep.mubr.f32.mxu0 0.0
        %1580 = vmatmul.mubr.f32.gmra.mrb[0].mxu0 %v1471
        %v1581 = vpop.f32.mrb[0].mxu0
        %v1582 = vadd.f32 0.0, %v1581
        %v1583 = vpop.f32.mrb[0].mxu0
        %1584 = vmatprep.mubr.f32.mxu0 0.0
        %1585 = vmatmul.mubr.f32.gmra.mrb[0].mxu0 %v1472
        %v1586 = vpop.f32.mrb[0].mxu0
        %v1587 = vadd.f32 0.0, %v1586
        %v1588 = vpop.f32.mrb[0].mxu0
        %1589 = vmatprep.mubr.f32.mxu0 0.0
        %1590 = vmatmul.mubr.f32.gmra.mrb[0].mxu0 %v1473
        %v1591 = vpop.f32.mrb[0].mxu0
        %v1592 = vadd.f32 0.0, %v1591
        %v1593 = vpop.f32.mrb[0].mxu0
        %1594 = vmatprep.mubr.f32.mxu0 0.0
        %1595 = vmatmul.mubr.f32.gmra.mrb[0].mxu0 %v1474
        %v1596 = vpop.f32.mrb[0].mxu0
        %v1597 = vadd.f32 0.0, %v1596
        %v1598 = vpop.f32.mrb[0].mxu0
        %1599 = vmatprep.mubr.f32.mxu0 0.0
        %1600 = vmatmul.mubr.f32.gmra.mrb[0].mxu0 %v1475
        %v1601 = vpop.f32.mrb[0].mxu0
        %v1602 = vadd.f32 0.0, %v1601
        %v1603 = vpop.f32.mrb[0].mxu0
        %1604 = vmatprep.mubr.f32.mxu0 0.0
        %1605 = vmatmul.mubr.f32.gmra.mrb[0].mxu0 %v1476
        %v1606 = vpop.f32.mrb[0].mxu0
        %v1607 = vadd.f32 0.0, %v1606
        %v1608 = vpop.f32.mrb[0].mxu0
        %1609 = vmatprep.mubr.f32.mxu0 0.0
        %1610 = vmatmul.mubr.f32.gmra.mrb[0].mxu0 %v1477
        %v1611 = vpop.f32.mrb[0].mxu0
        %v1612 = vadd.f32 0.0, %v1611
        %v1613 = vpop.f32.mrb[0].mxu0
        %1614 = vmatprep.mubr.f32.mxu0 0.0
        %1615 = vmatmul.mubr.f32.gmra.mrb[0].mxu0 %v1478
        %v1616 = vpop.f32.mrb[0].mxu0
        %v1617 = vadd.f32 0.0, %v1616
        %v1618 = vpop.f32.mrb[0].mxu0
        %1619 = vmatprep.mubr.f32.mxu0 0.0
        %1620 = vmatmul.mubr.f32.gmra.mrb[0].mxu0 %v1479
        %v1621 = vpop.f32.mrb[0].mxu0
        %v1622 = vadd.f32 0.0, %v1621
        %v1623 = vpop.f32.mrb[0].mxu0
        %1624 = vdwg.mxu0
        %v1625 = vadd.f32 %v1290, %v1547
        %v1626 = vadd.f32 %v1295, %v1552
        %v1627 = vadd.f32 %v1300, %v1557
        %v1628 = vadd.f32 %v1305, %v1562
        %v1629 = vadd.f32 %v1310, %v1567
        %v1630 = vadd.f32 %v1315, %v1572
        %v1631 = vadd.f32 %v1320, %v1577
        %v1632 = vadd.f32 %v1325, %v1582
        %v1633 = vadd.f32 %v1330, %v1587
        %v1634 = vadd.f32 %v1335, %v1592
        %v1635 = vadd.f32 %v1340, %v1597
        %v1636 = vadd.f32 %v1345, %v1602
        %v1637 = vadd.f32 %v1350, %v1607
        %v1638 = vadd.f32 %v1355, %v1612
        %v1639 = vadd.f32 %v1360, %v1617
        %v1640 = vadd.f32 %v1365, %v1622
        %v1641 = vrcp.pop %v1625
        %v1642 = vrcp.pop %v1626
        %v1643 = vrcp.pop %v1627
        %v1644 = vrcp.pop %v1628
        %v1645 = vrcp.pop %v1629
        %v1646 = vrcp.pop %v1630
        %v1647 = vrcp.pop %v1631
        %v1648 = vrcp.pop %v1632
        %v1649 = vrcp.pop %v1633
        %v1650 = vrcp.pop %v1634
        %v1651 = vrcp.pop %v1635
        %v1652 = vrcp.pop %v1636
        %v1653 = vrcp.pop %v1637
        %v1654 = vrcp.pop %v1638
        %v1655 = vrcp.pop %v1639
        %v1656 = vrcp.pop %v1640
        %1658 = vset.pattern.permute.xlu0 48
        %1659 = vperm.xlu0 %1658, %v1641
        %v1660 = vpop.permute.xlu0 %1659
        %1663 = vset.pattern.permute.xlu0 48
        %1664 = vperm.xlu0 %1663, %v1642
        %v1665 = vpop.permute.xlu0 %1664
        %1668 = vset.pattern.permute.xlu0 48
        %1669 = vperm.xlu0 %1668, %v1643
        %v1670 = vpop.permute.xlu0 %1669
        %1673 = vset.pattern.permute.xlu0 48
        %1674 = vperm.xlu0 %1673, %v1644
        %v1675 = vpop.permute.xlu0 %1674
        %1678 = vset.pattern.permute.xlu0 48
        %1679 = vperm.xlu0 %1678, %v1645
        %v1680 = vpop.permute.xlu0 %1679
        %1683 = vset.pattern.permute.xlu0 48
        %1684 = vperm.xlu0 %1683, %v1646
        %v1685 = vpop.permute.xlu0 %1684
        %1688 = vset.pattern.permute.xlu0 48
        %1689 = vperm.xlu0 %1688, %v1647
        %v1690 = vpop.permute.xlu0 %1689
        %1693 = vset.pattern.permute.xlu0 48
        %1694 = vperm.xlu0 %1693, %v1648
        %v1695 = vpop.permute.xlu0 %1694
        %1698 = vset.pattern.permute.xlu0 48
        %1699 = vperm.xlu0 %1698, %v1649
        %v1700 = vpop.permute.xlu0 %1699
        %1703 = vset.pattern.permute.xlu0 48
        %1704 = vperm.xlu0 %1703, %v1650
        %v1705 = vpop.permute.xlu0 %1704
        %1708 = vset.pattern.permute.xlu0 48
        %1709 = vperm.xlu0 %1708, %v1651
        %v1710 = vpop.permute.xlu0 %1709
        %1713 = vset.pattern.permute.xlu0 48
        %1714 = vperm.xlu0 %1713, %v1652
        %v1715 = vpop.permute.xlu0 %1714
        %1718 = vset.pattern.permute.xlu0 48
        %1719 = vperm.xlu0 %1718, %v1653
        %v1720 = vpop.permute.xlu0 %1719
        %1723 = vset.pattern.permute.xlu0 48
        %1724 = vperm.xlu0 %1723, %v1654
        %v1725 = vpop.permute.xlu0 %1724
        %1728 = vset.pattern.permute.xlu0 48
        %1729 = vperm.xlu0 %1728, %v1655
        %v1730 = vpop.permute.xlu0 %1729
        %1733 = vset.pattern.permute.xlu0 48
        %1734 = vperm.xlu0 %1733, %v1656
        %v1735 = vpop.permute.xlu0 %1734
        %v1737 = vmul.f32 %v1625, %v1660
        %v1738 = vmul.f32 %v1626, %v1665
        %v1739 = vmul.f32 %v1627, %v1670
        %v1740 = vmul.f32 %v1628, %v1675
        %v1741 = vmul.f32 %v1629, %v1680
        %v1742 = vmul.f32 %v1630, %v1685
        %v1743 = vmul.f32 %v1631, %v1690
        %v1744 = vmul.f32 %v1632, %v1695
        %v1745 = vmul.f32 %v1633, %v1700
        %v1746 = vmul.f32 %v1634, %v1705
        %v1747 = vmul.f32 %v1635, %v1710
        %v1748 = vmul.f32 %v1636, %v1715
        %v1749 = vmul.f32 %v1637, %v1720
        %v1750 = vmul.f32 %v1638, %v1725
        %v1751 = vmul.f32 %v1639, %v1730
        %v1752 = vmul.f32 %v1640, %v1735
        %v1753 = vld [vmem:[%s370] sm:$0xff]
        %v1754 = vld [vmem:[%s370 + $0x8] sm:$0xff]
        %v1755 = vld [vmem:[%s370 + $0x10] sm:$0xff]
        %v1756 = vld [vmem:[%s370 + $0x18] sm:$0xff]
        %v1757 = vld [vmem:[%s370 + $0x20] sm:$0xff]
        %v1758 = vld [vmem:[%s370 + $0x28] sm:$0xff]
        %v1759 = vld [vmem:[%s370 + $0x30] sm:$0xff]
        %v1760 = vld [vmem:[%s370 + $0x38] sm:$0xff]
        %v1761 = vld [vmem:[%s370 + $0x40] sm:$0xff]
        %v1762 = vld [vmem:[%s370 + $0x48] sm:$0xff]
        %v1763 = vld [vmem:[%s370 + $0x50] sm:$0xff]
        %v1764 = vld [vmem:[%s370 + $0x58] sm:$0xff]
        %v1765 = vld [vmem:[%s370 + $0x60] sm:$0xff]
        %v1766 = vld [vmem:[%s370 + $0x68] sm:$0xff]
        %v1767 = vld [vmem:[%s370 + $0x70] sm:$0xff]
        %v1768 = vld [vmem:[%s370 + $0x78] sm:$0xff]
        %v1769 = vadd.f32 %v1737, %v1753
        %v1770 = vadd.f32 %v1738, %v1754
        %v1771 = vadd.f32 %v1739, %v1755
        %v1772 = vadd.f32 %v1740, %v1756
        %v1773 = vadd.f32 %v1741, %v1757
        %v1774 = vadd.f32 %v1742, %v1758
        %v1775 = vadd.f32 %v1743, %v1759
        %v1776 = vadd.f32 %v1744, %v1760
        %v1777 = vadd.f32 %v1745, %v1761
        %v1778 = vadd.f32 %v1746, %v1762
        %v1779 = vadd.f32 %v1747, %v1763
        %v1780 = vadd.f32 %v1748, %v1764
        %v1781 = vadd.f32 %v1749, %v1765
        %v1782 = vadd.f32 %v1750, %v1766
        %v1783 = vadd.f32 %v1751, %v1767
        %v1784 = vadd.f32 %v1752, %v1768
        %v1785 = vld [vmem:[#allocation5] sm:$0xff]
        %v1786 = vld [vmem:[#allocation5 + $0x8] sm:$0xff]
        %v1787 = vld [vmem:[#allocation5 + $0x10] sm:$0xff]
        %v1788 = vld [vmem:[#allocation5 + $0x18] sm:$0xff]
        %v1789 = vld [vmem:[#allocation5 + $0x20] sm:$0xff]
        %v1790 = vld [vmem:[#allocation5 + $0x28] sm:$0xff]
        %v1791 = vld [vmem:[#allocation5 + $0x30] sm:$0xff]
        %v1792 = vld [vmem:[#allocation5 + $0x38] sm:$0xff]
        %v1793 = vld [vmem:[#allocation5 + $0x40] sm:$0xff]
        %v1794 = vld [vmem:[#allocation5 + $0x48] sm:$0xff]
        %v1795 = vld [vmem:[#allocation5 + $0x50] sm:$0xff]
        %v1796 = vld [vmem:[#allocation5 + $0x58] sm:$0xff]
        %v1797 = vld [vmem:[#allocation5 + $0x60] sm:$0xff]
        %v1798 = vld [vmem:[#allocation5 + $0x68] sm:$0xff]
        %v1799 = vld [vmem:[#allocation5 + $0x70] sm:$0xff]
        %v1800 = vld [vmem:[#allocation5 + $0x78] sm:$0xff]
        %v1801 = vld [vmem:[%s5] sm:$0x1]
        %v1803 = vlaneseq
        %v1804 = vshrl.u32 %v1803, 7
        %v1805 = vsub.s32 0, %v1804
        %v1806 = vrot.slane %v1801, %v1805
        %1808 = vmatprep.subr.mxu0 0.0
        %1809 = vmatpush1.msra.mxu0 %v1785
        %1810 = vmatprep.subr.mxu0 0.0
        %1811 = vmatpush1.msra.mxu0 %v1786
        %1812 = vmatprep.subr.mxu0 0.0
        %1813 = vmatpush1.msra.mxu0 %v1787
        %1814 = vmatprep.subr.mxu0 0.0
        %1815 = vmatpush1.msra.mxu0 %v1788
        %1816 = vmatprep.subr.mxu0 0.0
        %1817 = vmatpush1.msra.mxu0 %v1789
        %1818 = vmatprep.subr.mxu0 0.0
        %1819 = vmatpush1.msra.mxu0 %v1790
        %1820 = vmatprep.subr.mxu0 0.0
        %1821 = vmatpush1.msra.mxu0 %v1791
        %1822 = vmatprep.subr.mxu0 0.0
        %1823 = vmatpush1.msra.mxu0 %v1792
        %1824 = vmatprep.subr.mxu0 0.0
        %1825 = vmatpush1.msra.mxu0 %v1793
        %1826 = vmatprep.subr.mxu0 0.0
        %1827 = vmatpush1.msra.mxu0 %v1794
        %1828 = vmatprep.subr.mxu0 0.0
        %1829 = vmatpush1.msra.mxu0 %v1795
        %1830 = vmatprep.subr.mxu0 0.0
        %1831 = vmatpush1.msra.mxu0 %v1796
        %1832 = vmatprep.subr.mxu0 0.0
        %1833 = vmatpush1.msra.mxu0 %v1797
        %1834 = vmatprep.subr.mxu0 0.0
        %1835 = vmatpush1.msra.mxu0 %v1798
        %1836 = vmatprep.subr.mxu0 0.0
        %1837 = vmatpush1.msra.mxu0 %v1799
        %1838 = vmatprep.subr.mxu0 0.0
        %1839 = vmatpush1.msra.mxu0 %v1800
        %1840 = vmatprep.subr.mxu0 0.0
        %1841 = vmatpush1.msra.mxu0 0.0
        %1842 = vmatprep.subr.mxu0 0.0
        %1843 = vmatpush1.msra.mxu0 0.0
        %1844 = vmatprep.subr.mxu0 0.0
        %1845 = vmatpush1.msra.mxu0 0.0
        %1846 = vmatprep.subr.mxu0 0.0
        %1847 = vmatpush1.msra.mxu0 0.0
        %1848 = vmatprep.subr.mxu0 0.0
        %1849 = vmatpush1.msra.mxu0 0.0
        %1850 = vmatprep.subr.mxu0 0.0
        %1851 = vmatpush1.msra.mxu0 0.0
        %1852 = vmatprep.subr.mxu0 0.0
        %1853 = vmatpush1.msra.mxu0 0.0
        %1854 = vmatprep.subr.mxu0 0.0
        %1855 = vmatpush1.msra.mxu0 0.0
        %1856 = vmatprep.subr.mxu0 0.0
        %1857 = vmatpush1.msra.mxu0 0.0
        %1858 = vmatprep.subr.mxu0 0.0
        %1859 = vmatpush1.msra.mxu0 0.0
        %1860 = vmatprep.subr.mxu0 0.0
        %1861 = vmatpush1.msra.mxu0 0.0
        %1862 = vmatprep.subr.mxu0 0.0
        %1863 = vmatpush1.msra.mxu0 0.0
        %1864 = vmatprep.subr.mxu0 0.0
        %1865 = vmatpush1.msra.mxu0 0.0
        %1866 = vmatprep.subr.mxu0 0.0
        %1867 = vmatpush1.msra.mxu0 0.0
        %1868 = vmatprep.subr.mxu0 0.0
        %1869 = vmatpush1.msra.mxu0 0.0
        %1870 = vmatprep.subr.mxu0 0.0
        %1871 = vmatpush1.msra.mxu0 0.0
        %1872 = vmatprep.mubr.f32.mxu0 0.0
        %1873 = vmatmul.mubr.f32.gmra.mrb[0].mxu0 %v1769
        %v1874 = vpop.f32.mrb[0].mxu0
        %v1875 = vadd.f32 %v1806, %v1874
        %v1876 = vpop.f32.mrb[0].mxu0
        %1877 = vmatprep.mubr.f32.mxu0 0.0
        %1878 = vmatmul.mubr.f32.gmra.mrb[0].mxu0 %v1770
        %v1879 = vpop.f32.mrb[0].mxu0
        %v1880 = vadd.f32 %v1806, %v1879
        %v1881 = vpop.f32.mrb[0].mxu0
        %1882 = vmatprep.mubr.f32.mxu0 0.0
        %1883 = vmatmul.mubr.f32.gmra.mrb[0].mxu0 %v1771
        %v1884 = vpop.f32.mrb[0].mxu0
        %v1885 = vadd.f32 %v1806, %v1884
        %v1886 = vpop.f32.mrb[0].mxu0
        %1887 = vmatprep.mubr.f32.mxu0 0.0
        %1888 = vmatmul.mubr.f32.gmra.mrb[0].mxu0 %v1772
        %v1889 = vpop.f32.mrb[0].mxu0
        %v1890 = vadd.f32 %v1806, %v1889
        %v1891 = vpop.f32.mrb[0].mxu0
        %1892 = vmatprep.mubr.f32.mxu0 0.0
        %1893 = vmatmul.mubr.f32.gmra.mrb[0].mxu0 %v1773
        %v1894 = vpop.f32.mrb[0].mxu0
        %v1895 = vadd.f32 %v1806, %v1894
        %v1896 = vpop.f32.mrb[0].mxu0
        %1897 = vmatprep.mubr.f32.mxu0 0.0
        %1898 = vmatmul.mubr.f32.gmra.mrb[0].mxu0 %v1774
        %v1899 = vpop.f32.mrb[0].mxu0
        %v1900 = vadd.f32 %v1806, %v1899
        %v1901 = vpop.f32.mrb[0].mxu0
        %1902 = vmatprep.mubr.f32.mxu0 0.0
        %1903 = vmatmul.mubr.f32.gmra.mrb[0].mxu0 %v1775
        %v1904 = vpop.f32.mrb[0].mxu0
        %v1905 = vadd.f32 %v1806, %v1904
        %v1906 = vpop.f32.mrb[0].mxu0
        %1907 = vmatprep.mubr.f32.mxu0 0.0
        %1908 = vmatmul.mubr.f32.gmra.mrb[0].mxu0 %v1776
        %v1909 = vpop.f32.mrb[0].mxu0
        %v1910 = vadd.f32 %v1806, %v1909
        %v1911 = vpop.f32.mrb[0].mxu0
        %1912 = vmatprep.mubr.f32.mxu0 0.0
        %1913 = vmatmul.mubr.f32.gmra.mrb[0].mxu0 %v1777
        %v1914 = vpop.f32.mrb[0].mxu0
        %v1915 = vadd.f32 %v1806, %v1914
        %v1916 = vpop.f32.mrb[0].mxu0
        %1917 = vmatprep.mubr.f32.mxu0 0.0
        %1918 = vmatmul.mubr.f32.gmra.mrb[0].mxu0 %v1778
        %v1919 = vpop.f32.mrb[0].mxu0
        %v1920 = vadd.f32 %v1806, %v1919
        %v1921 = vpop.f32.mrb[0].mxu0
        %1922 = vmatprep.mubr.f32.mxu0 0.0
        %1923 = vmatmul.mubr.f32.gmra.mrb[0].mxu0 %v1779
        %v1924 = vpop.f32.mrb[0].mxu0
        %v1925 = vadd.f32 %v1806, %v1924
        %v1926 = vpop.f32.mrb[0].mxu0
        %1927 = vmatprep.mubr.f32.mxu0 0.0
        %1928 = vmatmul.mubr.f32.gmra.mrb[0].mxu0 %v1780
        %v1929 = vpop.f32.mrb[0].mxu0
        %v1930 = vadd.f32 %v1806, %v1929
        %v1931 = vpop.f32.mrb[0].mxu0
        %1932 = vmatprep.mubr.f32.mxu0 0.0
        %1933 = vmatmul.mubr.f32.gmra.mrb[0].mxu0 %v1781
        %v1934 = vpop.f32.mrb[0].mxu0
        %v1935 = vadd.f32 %v1806, %v1934
        %v1936 = vpop.f32.mrb[0].mxu0
        %1937 = vmatprep.mubr.f32.mxu0 0.0
        %1938 = vmatmul.mubr.f32.gmra.mrb[0].mxu0 %v1782
        %v1939 = vpop.f32.mrb[0].mxu0
        %v1940 = vadd.f32 %v1806, %v1939
        %v1941 = vpop.f32.mrb[0].mxu0
        %1942 = vmatprep.mubr.f32.mxu0 0.0
        %1943 = vmatmul.mubr.f32.gmra.mrb[0].mxu0 %v1783
        %v1944 = vpop.f32.mrb[0].mxu0
        %v1945 = vadd.f32 %v1806, %v1944
        %v1946 = vpop.f32.mrb[0].mxu0
        %1947 = vmatprep.mubr.f32.mxu0 0.0
        %1948 = vmatmul.mubr.f32.gmra.mrb[0].mxu0 %v1784
        %v1949 = vpop.f32.mrb[0].mxu0
        %v1950 = vadd.f32 %v1806, %v1949
        %v1951 = vpop.f32.mrb[0].mxu0
        %1952 = vdwg.mxu0
        %v1953 = vmax.f32 %v1875, 0.0
        %v1954 = vmax.f32 %v1880, 0.0
        %v1955 = vmax.f32 %v1885, 0.0
        %v1956 = vmax.f32 %v1890, 0.0
        %v1957 = vmax.f32 %v1895, 0.0
        %v1958 = vmax.f32 %v1900, 0.0
        %v1959 = vmax.f32 %v1905, 0.0
        %v1960 = vmax.f32 %v1910, 0.0
        %v1961 = vmax.f32 %v1915, 0.0
        %v1962 = vmax.f32 %v1920, 0.0
        %v1963 = vmax.f32 %v1925, 0.0
        %v1964 = vmax.f32 %v1930, 0.0
        %v1965 = vmax.f32 %v1935, 0.0
        %v1966 = vmax.f32 %v1940, 0.0
        %v1967 = vmax.f32 %v1945, 0.0
        %v1968 = vmax.f32 %v1950, 0.0
        %v1969 = vld [vmem:[#allocation7] sm:$0xff]
        %v1970 = vld [vmem:[#allocation7 + $0x8] sm:$0xff]
        %v1971 = vld [vmem:[#allocation7 + $0x10] sm:$0xff]
        %v1972 = vld [vmem:[#allocation7 + $0x18] sm:$0xff]
        %v1973 = vld [vmem:[#allocation7 + $0x20] sm:$0xff]
        %v1974 = vld [vmem:[#allocation7 + $0x28] sm:$0xff]
        %v1975 = vld [vmem:[#allocation7 + $0x30] sm:$0xff]
        %v1976 = vld [vmem:[#allocation7 + $0x38] sm:$0xff]
        %v1977 = vld [vmem:[#allocation7 + $0x40] sm:$0xff]
        %v1978 = vld [vmem:[#allocation7 + $0x48] sm:$0xff]
        %v1979 = vld [vmem:[#allocation7 + $0x50] sm:$0xff]
        %v1980 = vld [vmem:[#allocation7 + $0x58] sm:$0xff]
        %v1981 = vld [vmem:[#allocation7 + $0x60] sm:$0xff]
        %v1982 = vld [vmem:[#allocation7 + $0x68] sm:$0xff]
        %v1983 = vld [vmem:[#allocation7 + $0x70] sm:$0xff]
        %v1984 = vld [vmem:[#allocation7 + $0x78] sm:$0xff]
        %v1985 = vld [vmem:[%s7] sm:$0x1]
        %v1987 = vlaneseq
        %v1988 = vshrl.u32 %v1987, 7
        %v1989 = vsub.s32 0, %v1988
        %v1990 = vrot.slane %v1985, %v1989
        %1992 = vmatprep.subr.mxu0 0.0
        %1993 = vmatpush1.msra.mxu0 %v1969
        %1994 = vmatprep.subr.mxu0 0.0
        %1995 = vmatpush1.msra.mxu0 %v1970
        %1996 = vmatprep.subr.mxu0 0.0
        %1997 = vmatpush1.msra.mxu0 %v1971
        %1998 = vmatprep.subr.mxu0 0.0
        %1999 = vmatpush1.msra.mxu0 %v1972
        %2000 = vmatprep.subr.mxu0 0.0
        %2001 = vmatpush1.msra.mxu0 %v1973
        %2002 = vmatprep.subr.mxu0 0.0
        %2003 = vmatpush1.msra.mxu0 %v1974
        %2004 = vmatprep.subr.mxu0 0.0
        %2005 = vmatpush1.msra.mxu0 %v1975
        %2006 = vmatprep.subr.mxu0 0.0
        %2007 = vmatpush1.msra.mxu0 %v1976
        %2008 = vmatprep.subr.mxu0 0.0
        %2009 = vmatpush1.msra.mxu0 %v1977
        %2010 = vmatprep.subr.mxu0 0.0
        %2011 = vmatpush1.msra.mxu0 %v1978
        %2012 = vmatprep.subr.mxu0 0.0
        %2013 = vmatpush1.msra.mxu0 %v1979
        %2014 = vmatprep.subr.mxu0 0.0
        %2015 = vmatpush1.msra.mxu0 %v1980
        %2016 = vmatprep.subr.mxu0 0.0
        %2017 = vmatpush1.msra.mxu0 %v1981
        %2018 = vmatprep.subr.mxu0 0.0
        %2019 = vmatpush1.msra.mxu0 %v1982
        %2020 = vmatprep.subr.mxu0 0.0
        %2021 = vmatpush1.msra.mxu0 %v1983
        %2022 = vmatprep.subr.mxu0 0.0
        %2023 = vmatpush1.msra.mxu0 %v1984
        %2024 = vmatprep.subr.mxu0 0.0
        %2025 = vmatpush1.msra.mxu0 0.0
        %2026 = vmatprep.subr.mxu0 0.0
        %2027 = vmatpush1.msra.mxu0 0.0
        %2028 = vmatprep.subr.mxu0 0.0
        %2029 = vmatpush1.msra.mxu0 0.0
        %2030 = vmatprep.subr.mxu0 0.0
        %2031 = vmatpush1.msra.mxu0 0.0
        %2032 = vmatprep.subr.mxu0 0.0
        %2033 = vmatpush1.msra.mxu0 0.0
        %2034 = vmatprep.subr.mxu0 0.0
        %2035 = vmatpush1.msra.mxu0 0.0
        %2036 = vmatprep.subr.mxu0 0.0
        %2037 = vmatpush1.msra.mxu0 0.0
        %2038 = vmatprep.subr.mxu0 0.0
        %2039 = vmatpush1.msra.mxu0 0.0
        %2040 = vmatprep.subr.mxu0 0.0
        %2041 = vmatpush1.msra.mxu0 0.0
        %2042 = vmatprep.subr.mxu0 0.0
        %2043 = vmatpush1.msra.mxu0 0.0
        %2044 = vmatprep.subr.mxu0 0.0
        %2045 = vmatpush1.msra.mxu0 0.0
        %2046 = vmatprep.subr.mxu0 0.0
        %2047 = vmatpush1.msra.mxu0 0.0
        %2048 = vmatprep.subr.mxu0 0.0
        %2049 = vmatpush1.msra.mxu0 0.0
        %2050 = vmatprep.subr.mxu0 0.0
        %2051 = vmatpush1.msra.mxu0 0.0
        %2052 = vmatprep.subr.mxu0 0.0
        %2053 = vmatpush1.msra.mxu0 0.0
        %2054 = vmatprep.subr.mxu0 0.0
        %2055 = vmatpush1.msra.mxu0 0.0
        %2056 = vmatprep.mubr.f32.mxu0 0.0
        %2057 = vmatmul.mubr.f32.gmra.mrb[0].mxu0 %v1953
        %v2058 = vpop.f32.mrb[0].mxu0
        %v2059 = vadd.f32 %v1990, %v2058
        %v2060 = vpop.f32.mrb[0].mxu0
        %2061 = vmatprep.mubr.f32.mxu0 0.0
        %2062 = vmatmul.mubr.f32.gmra.mrb[0].mxu0 %v1954
        %v2063 = vpop.f32.mrb[0].mxu0
        %v2064 = vadd.f32 %v1990, %v2063
        %v2065 = vpop.f32.mrb[0].mxu0
        %2066 = vmatprep.mubr.f32.mxu0 0.0
        %2067 = vmatmul.mubr.f32.gmra.mrb[0].mxu0 %v1955
        %v2068 = vpop.f32.mrb[0].mxu0
        %v2069 = vadd.f32 %v1990, %v2068
        %v2070 = vpop.f32.mrb[0].mxu0
        %2071 = vmatprep.mubr.f32.mxu0 0.0
        %2072 = vmatmul.mubr.f32.gmra.mrb[0].mxu0 %v1956
        %v2073 = vpop.f32.mrb[0].mxu0
        %v2074 = vadd.f32 %v1990, %v2073
        %v2075 = vpop.f32.mrb[0].mxu0
        %2076 = vmatprep.mubr.f32.mxu0 0.0
        %2077 = vmatmul.mubr.f32.gmra.mrb[0].mxu0 %v1957
        %v2078 = vpop.f32.mrb[0].mxu0
        %v2079 = vadd.f32 %v1990, %v2078
        %v2080 = vpop.f32.mrb[0].mxu0
        %2081 = vmatprep.mubr.f32.mxu0 0.0
        %2082 = vmatmul.mubr.f32.gmra.mrb[0].mxu0 %v1958
        %v2083 = vpop.f32.mrb[0].mxu0
        %v2084 = vadd.f32 %v1990, %v2083
        %v2085 = vpop.f32.mrb[0].mxu0
        %2086 = vmatprep.mubr.f32.mxu0 0.0
        %2087 = vmatmul.mubr.f32.gmra.mrb[0].mxu0 %v1959
        %v2088 = vpop.f32.mrb[0].mxu0
        %v2089 = vadd.f32 %v1990, %v2088
        %v2090 = vpop.f32.mrb[0].mxu0
        %2091 = vmatprep.mubr.f32.mxu0 0.0
        %2092 = vmatmul.mubr.f32.gmra.mrb[0].mxu0 %v1960
        %v2093 = vpop.f32.mrb[0].mxu0
        %v2094 = vadd.f32 %v1990, %v2093
        %v2095 = vpop.f32.mrb[0].mxu0
        %2096 = vmatprep.mubr.f32.mxu0 0.0
        %2097 = vmatmul.mubr.f32.gmra.mrb[0].mxu0 %v1961
        %v2098 = vpop.f32.mrb[0].mxu0
        %v2099 = vadd.f32 %v1990, %v2098
        %v2100 = vpop.f32.mrb[0].mxu0
        %2101 = vmatprep.mubr.f32.mxu0 0.0
        %2102 = vmatmul.mubr.f32.gmra.mrb[0].mxu0 %v1962
        %v2103 = vpop.f32.mrb[0].mxu0
        %v2104 = vadd.f32 %v1990, %v2103
        %v2105 = vpop.f32.mrb[0].mxu0
        %2106 = vmatprep.mubr.f32.mxu0 0.0
        %2107 = vmatmul.mubr.f32.gmra.mrb[0].mxu0 %v1963
        %v2108 = vpop.f32.mrb[0].mxu0
        %v2109 = vadd.f32 %v1990, %v2108
        %v2110 = vpop.f32.mrb[0].mxu0
        %2111 = vmatprep.mubr.f32.mxu0 0.0
        %2112 = vmatmul.mubr.f32.gmra.mrb[0].mxu0 %v1964
        %v2113 = vpop.f32.mrb[0].mxu0
        %v2114 = vadd.f32 %v1990, %v2113
        %v2115 = vpop.f32.mrb[0].mxu0
        %2116 = vmatprep.mubr.f32.mxu0 0.0
        %2117 = vmatmul.mubr.f32.gmra.mrb[0].mxu0 %v1965
        %v2118 = vpop.f32.mrb[0].mxu0
        %v2119 = vadd.f32 %v1990, %v2118
        %v2120 = vpop.f32.mrb[0].mxu0
        %2121 = vmatprep.mubr.f32.mxu0 0.0
        %2122 = vmatmul.mubr.f32.gmra.mrb[0].mxu0 %v1966
        %v2123 = vpop.f32.mrb[0].mxu0
        %v2124 = vadd.f32 %v1990, %v2123
        %v2125 = vpop.f32.mrb[0].mxu0
        %2126 = vmatprep.mubr.f32.mxu0 0.0
        %2127 = vmatmul.mubr.f32.gmra.mrb[0].mxu0 %v1967
        %v2128 = vpop.f32.mrb[0].mxu0
        %v2129 = vadd.f32 %v1990, %v2128
        %v2130 = vpop.f32.mrb[0].mxu0
        %2131 = vmatprep.mubr.f32.mxu0 0.0
        %2132 = vmatmul.mubr.f32.gmra.mrb[0].mxu0 %v1968
        %v2133 = vpop.f32.mrb[0].mxu0
        %v2134 = vadd.f32 %v1990, %v2133
        %v2135 = vpop.f32.mrb[0].mxu0
        %2136 = vdwg.mxu0
        %2137 = vst [vmem:[%s359] sm:$0xff] %v2059
        %2138 = vst [vmem:[%s359 + $0x8] sm:$0xff] %v2064
        %2139 = vst [vmem:[%s359 + $0x10] sm:$0xff] %v2069
        %2140 = vst [vmem:[%s359 + $0x18] sm:$0xff] %v2074
        %2141 = vst [vmem:[%s359 + $0x20] sm:$0xff] %v2079
        %2142 = vst [vmem:[%s359 + $0x28] sm:$0xff] %v2084
        %2143 = vst [vmem:[%s359 + $0x30] sm:$0xff] %v2089
        %2144 = vst [vmem:[%s359 + $0x38] sm:$0xff] %v2094
        %2145 = vst [vmem:[%s359 + $0x40] sm:$0xff] %v2099
        %2146 = vst [vmem:[%s359 + $0x48] sm:$0xff] %v2104
        %2147 = vst [vmem:[%s359 + $0x50] sm:$0xff] %v2109
        %2148 = vst [vmem:[%s359 + $0x58] sm:$0xff] %v2114
        %2149 = vst [vmem:[%s359 + $0x60] sm:$0xff] %v2119
        %2150 = vst [vmem:[%s359 + $0x68] sm:$0xff] %v2124
        %2151 = vst [vmem:[%s359 + $0x70] sm:$0xff] %v2129
        %2152 = vst [vmem:[%s359 + $0x78] sm:$0xff] %v2134
        %s2153 = sand.u32 %s210, 1
        %s2154 = scalar_lea.sflag [#allocation4], %s2153
        %s2155 = sand.u32 %s210, 1
        %s2156 = smul.addr %s2155, 128
        %s2157 = scalar_lea.vmem [#allocation8], %s2156
        // Predicated region
        $region65: #{tpu_custom_call.1} parent=51 // pred_check
          %p2158 = pneg %p220
        $region66: #{tpu_custom_call.1} parent=51 // pred_check_branch
          %2160 = sbr.rel (%p2158) target = $region68
        $region67: #{tpu_custom_call.1} parent=51 // pred_region
          %s2161 = smul.u32 16, %s24
          %s2163 = ssub.s32 2048, 2048
          %2164 = vsyncadd %s2154, %s2163
          %s2165 = smul.addr %s2161, 128
          %s2166 = scalar_lea.hbm %s8, %s2165
          %s2167 = sshll.u32 %s2157, 4
          %s2168 = int_to_ptr.vmem [resolvable:$true] %s2167
          %2173 = dma.vmem_to_hbm [thread:$0]  %s2168, 2048, %s2166, %s2154, 128, 128, 8
        $region68: #{tpu_custom_call.1} parent=51 // pred_fallthru
          _
      $region52: #{tpu_custom_call.1} parent=5 // pred_fallthru
        _
      %p2174 = scmp.le.s32.totalorder 2, %s19
      // Predicated region
      $region69: #{tpu_custom_call.1} parent=5 // pred_check
        %p2175 = pneg %p2174
      $region70: #{tpu_custom_call.1} parent=5 // pred_check_branch
        %2177 = sbr.rel (%p2175) target = $region72
      $region71: #{tpu_custom_call.1} parent=5 // pred_region
        %s2178 = ssub.s32 %s19, 2
        // Predicated region
        $region73: #{tpu_custom_call.1} parent=71 // pred_check
          %p2179 = pneg %p226
        $region74: #{tpu_custom_call.1} parent=71 // pred_check_branch
          %2181 = sbr.rel (%p2179) target = $region76
        $region75: #{tpu_custom_call.1} parent=71 // pred_region
          %s2182 = sand.u32 %s211, 1
          %s2183 = scalar_lea.sflag [#allocation4], %s2182
          %s2184 = sand.u32 %s211, 1
          %s2185 = smul.addr %s2184, 128
          %s2186 = scalar_lea.vmem [#allocation8], %s2185
          %2187 = dma.done %s2183, 2048
        $region76: #{tpu_custom_call.1} parent=71 // pred_fallthru
          _
      $region72: #{tpu_custom_call.1} parent=5 // pred_fallthru
        _
    $region6: #{tpu_custom_call.1} parent=1 // loop_footer
      %s23 = sadd.s32 1, %s19
    $region7: #{tpu_custom_call.1} parent=1 // loop_footer_branch
      %18 = sbr.rel target = $region3
    $region8: #{tpu_custom_call.1} parent=1 // loop_exit
      _
    %2188 = vsyncpa [#allocation3], 1
    %s2189 = scalar_lea.sflag [#allocation3], 1
    %2190 = vsyncpa %s2189, 1
    %2191 = vsyncpa [#allocation6], 1
    %2192 = vsyncpa [#allocation4], 1
    %s2193 = scalar_lea.sflag [#allocation4], 1
    %2194 = vsyncpa %s2193, 1

</llo_original>
